<compile_context>
chip_gen: v5e
topology: v5e:2x2
jax: 0.10.0
libtpu: 0.0.40
codegen_flags: <defaults>
</compile_context>

<pallas_src>
import math
from functools import lru_cache, partial

import jax
import jax.numpy as jnp
from jax.experimental import pallas as pl
from jax.experimental.pallas import tpu as pltpu


_LANE = 128          # every feature dim padded to a multiple of the 128-wide lane axis
_BATCH_GRANULE = 256  # batch padded to a multiple of this (bounds pad waste, few shapes)


def _round_up(x, m):
    return ((x + m - 1) // m) * m


# ---------------------------------------------------------------------------
# Kernel
# ---------------------------------------------------------------------------
def _mlp_kernel(x_ref,
                w1_ref, b1_ref,
                w2_ref, b2_ref,
                w3_ref, b3_ref,
                w4_ref, b4_ref,
                w5_ref, b5_ref,
                o_ref):
    """relu(...relu(relu(x@W1+b1)@W2+b2)...@W5+b5).

    x / W are bf16 (MXU-native); accumulation, bias add and ReLU stay in f32 (VPU).
    """
    h = x_ref[...]                                     # bf16 activations
    layers = ((w1_ref, b1_ref), (w2_ref, b2_ref), (w3_ref, b3_ref),
              (w4_ref, b4_ref), (w5_ref, b5_ref))
    n = len(layers)
    for idx, (w_ref, b_ref) in enumerate(layers):
        acc = jnp.dot(h, w_ref[...], preferred_element_type=jnp.float32)
        acc = jnp.maximum(acc + b_ref[...], 0.0)       # bias + ReLU in f32
        h = acc.astype(jnp.bfloat16) if idx + 1 < n else acc
    o_ref[...] = h.astype(o_ref.dtype)


# ---------------------------------------------------------------------------
# Tiling / resource sizing (all static Python ints)
# ---------------------------------------------------------------------------
@lru_cache(maxsize=1)
def _tb_large():
    """Largest batch tile we will use.  v5e is MXU-bound here -> keep 512;
    v6e/v7x are per-step-overhead bound -> allow 1024."""
    try:
        kind = jax.devices()[0].device_kind.lower()
    except Exception:
        return 512
    return 512 if "v5" in kind else 1024


def _pick_batch_tiling(batch):
    """Return (padded_batch, batch_tile).

    Fixed granularity (multiple of 256) bounds pad waste and recompiles.
    The tile always gives grid >= 2 steps (both v7x TensorCores busy) and
    prefers an even number of steps (balanced across 2 cores).
    """
    b_p = _round_up(max(batch, 1), _BATCH_GRANULE)
    candidates = [t for t in (_tb_large(), 512, 256, 128) if t <= b_p // 2]
    for tb in candidates:                               # prefer even grids
        if b_p % tb == 0 and (b_p // tb) % 2 == 0:
            return b_p, tb
    for tb in candidates:
        if b_p % tb == 0:
            return b_p, tb
    return b_p, 128


def _vmem_limit_bytes(tb, layers):
    """Real VMEM footprint of the pipeline + headroom (never the full 64 MiB of v7x)."""
    w_bytes = sum(w.size * w.dtype.itemsize + b.size * b.dtype.itemsize
                  for w, b in layers)
    in_p = layers[0][0].shape[0]
    out_p = layers[-1][0].shape[1]
    max_h = max(w.shape[1] for w, _ in layers)
    io_tiles = 2 * tb * in_p * 2 + 2 * tb * out_p * 4   # double-buffered x (bf16) + out (f32)
    interm = 3 * tb * max_h * 4                          # a few live f32 intermediates
    total = 2 * w_bytes + io_tiles + interm + (4 << 20)  # + compiler-temp slack
    return int(min(max(total, 8 << 20), 32 << 20))


# ---------------------------------------------------------------------------
# pallas_call wrapper
# ---------------------------------------------------------------------------
def _pallas_mlp(x_pad, layers, tb):
    b_p, f_in = x_pad.shape
    f_out = layers[-1][0].shape[1]
    grid = (b_p // tb,)

    in_specs = [pl.BlockSpec((tb, f_in), lambda i: (i, 0))]
    flat_args = [x_pad]
    for w, b in layers:
        # Resident weights/biases: constant index_map -> same block every grid step,
        # so they are DMA'd once and reused across the whole batch loop.
        in_specs.append(pl.BlockSpec(w.shape, lambda i: (0, 0)))
        in_specs.append(pl.BlockSpec(b.shape, lambda i: (0, 0)))
        flat_args.append(w)
        flat_args.append(b)
    # NOTE: pipeline_mode=pl.Buffered(1) on the resident specs would save ~0.5 MiB of
    # VMEM; skipped as low-value to keep the known-good lowering configuration.

    flops = 2 * b_p * sum(w.shape[0] * w.shape[1] for w, _ in layers)
    bytes_accessed = (x_pad.size * x_pad.dtype.itemsize
                      + sum(w.size * w.dtype.itemsize + b.size * b.dtype.itemsize
                            for w, b in layers)
                      + b_p * f_out * 4)

    return pl.pallas_call(
        _mlp_kernel,
        out_shape=jax.ShapeDtypeStruct((b_p, f_out), jnp.float32),
        grid=grid,
        in_specs=in_specs,
        out_specs=pl.BlockSpec((tb, f_out), lambda i: (i, 0)),
        compiler_params=pltpu.CompilerParams(
            dimension_semantics=("parallel",),
            vmem_limit_bytes=_vmem_limit_bytes(tb, layers),
        ),
        cost_estimate=pl.CostEstimate(
            flops=flops, transcendentals=0, bytes_accessed=bytes_accessed),
    )(*flat_args)


@partial(jax.jit, static_argnames=("out_features",))
def _forward_jit(x, layers, out_features):
    batch, in_features = x.shape
    in_p = layers[0][0].shape[0]

    b_p, tb = _pick_batch_tiling(batch)
    # Pad x directly in bf16 (no intermediate f32 padded buffer).
    x_pad = jnp.zeros((b_p, in_p), jnp.bfloat16).at[:batch, :in_features].set(
        x.astype(jnp.bfloat16))

    out_pad = _pallas_mlp(x_pad, layers, tb)
    return out_pad[:batch, :out_features]


# ---------------------------------------------------------------------------
# Public API
# ---------------------------------------------------------------------------
def prepare_params(params):
    """One-time preparation: pad feature dims to multiples of 128, cast weights to bf16.

    params: list of (W[in,out] f32, b[out] f32).  Returns a dict reusable across calls.
    """
    layers = []
    for w, b in params:
        din, dout = w.shape
        din_p, dout_p = _round_up(din, _LANE), _round_up(dout, _LANE)
        w_p = jnp.zeros((din_p, dout_p), jnp.bfloat16).at[:din, :dout].set(
            w.astype(jnp.bfloat16))
        b_p = jnp.zeros((1, dout_p), jnp.float32).at[0, :dout].set(b)
        layers.append((w_p, b_p))
    return {
        "layers": tuple(layers),
        "in_features": params[0][0].shape[0],
        "out_features": params[-1][0].shape[1],
    }


def mlp_forward(x, prepared):
    """x: [B, input_size] f32; prepared: output of prepare_params()."""
    assert x.ndim == 2 and x.shape[1] == prepared["in_features"]
    return _forward_jit(x, prepared["layers"], out_features=prepared["out_features"])


# ---------------------------------------------------------------------------
# Parameter init (mimics torch.nn.Linear default) and references
# ---------------------------------------------------------------------------
def init_linear_params(key, in_features, out_features):
    k_w, k_b = jax.random.split(key)
    bound = 1.0 / math.sqrt(in_features)
    w_torch = jax.random.uniform(k_w, (out_features, in_features),
                                 minval=-bound, maxval=bound, dtype=jnp.float32)
    b = jax.random.uniform(k_b, (out_features,),
                           minval=-bound, maxval=bound, dtype=jnp.float32)
    return w_torch.T, b                                  # [in, out] for the kernel


def build_net_params(key, input_size, output_size):
    dims = [input_size, 64, 128, 256, 512, output_size]
    keys = jax.random.split(key, len(dims) - 1)
    return [init_linear_params(k, dims[i], dims[i + 1])
            for i, k in enumerate(keys)]


def _reference_bf16(x, params):
    """Pure-JAX reference with the same bf16-input / f32-accumulate recipe."""
    h = x.astype(jnp.bfloat16)
    n = len(params)
    for idx, (w, b) in enumerate(params):
        acc = jnp.dot(h, w.astype(jnp.bfloat16), preferred_element_type=jnp.float32)
        acc = jnp.maximum(acc + b, 0.0)
        h = acc.astype(jnp.bfloat16) if idx + 1 < n else acc
    return h


if __name__ == "__main__":
    key = jax.random.PRNGKey(0)
    k_params, k_x = jax.random.split(key)

    batch = 2
    input_size = 32
    output_size = 16

    params = build_net_params(k_params, input_size, output_size)
    prepared = prepare_params(params)                    # one-time pad + bf16 cast
    x = jax.random.normal(k_x, (batch, input_size), dtype=jnp.float32)

    out = mlp_forward(x, prepared)
    jax.block_until_ready(out)
    assert out.shape == (batch, output_size)

    # Check against a bf16-emulated pure-JAX reference (same precision recipe).
    ref = _reference_bf16(x, params)
    assert jnp.allclose(out, ref, atol=1e-2, rtol=1e-2)

    # Loose sanity check against full-f32 math (the PyTorch forward, incl. final ReLU).
    ref32 = x
    for w, b in params:
        ref32 = jnp.maximum(ref32 @ w + b, 0.0)
    assert jnp.allclose(out, ref32, atol=5e-2, rtol=5e-2)

    print("KERNEL_OK")
</pallas_src>

<mosaic_0001>
module attributes {stable_mosaic.version = 11 : i64} {
  func.func @_mlp_kernel(%arg0: i32, %arg1: memref<128x128xbf16, #tpu.memory_space<vmem>>, %arg2: memref<128x128xbf16, #tpu.memory_space<vmem>>, %arg3: memref<1x128xf32, #tpu.memory_space<vmem>>, %arg4: memref<128x128xbf16, #tpu.memory_space<vmem>>, %arg5: memref<1x128xf32, #tpu.memory_space<vmem>>, %arg6: memref<128x256xbf16, #tpu.memory_space<vmem>>, %arg7: memref<1x256xf32, #tpu.memory_space<vmem>>, %arg8: memref<256x512xbf16, #tpu.memory_space<vmem>>, %arg9: memref<1x512xf32, #tpu.memory_space<vmem>>, %arg10: memref<512x128xbf16, #tpu.memory_space<vmem>>, %arg11: memref<1x128xf32, #tpu.memory_space<vmem>>, %arg12: memref<128x128xf32, #tpu.memory_space<vmem>>) attributes {dimension_semantics = [#tpu.dimension_semantics<parallel>], iteration_bounds = array<i64: 2>, scalar_prefetch = 0 : i64, scratch_operands = 0 : i64, tpu.core_type = #tpu.core_type<tc>, window_params = [{transform_indices = @transform_0, window_bounds = array<i64: 128, 128>}, {pipeline_mode = #tpu.pipeline_mode<synchronous>, transform_indices = @transform_1, window_bounds = array<i64: 128, 128>}, {pipeline_mode = #tpu.pipeline_mode<synchronous>, transform_indices = @transform_2, window_bounds = array<i64: 1, 128>}, {pipeline_mode = #tpu.pipeline_mode<synchronous>, transform_indices = @transform_3, window_bounds = array<i64: 128, 128>}, {pipeline_mode = #tpu.pipeline_mode<synchronous>, transform_indices = @transform_4, window_bounds = array<i64: 1, 128>}, {pipeline_mode = #tpu.pipeline_mode<synchronous>, transform_indices = @transform_5, window_bounds = array<i64: 128, 256>}, {pipeline_mode = #tpu.pipeline_mode<synchronous>, transform_indices = @transform_6, window_bounds = array<i64: 1, 256>}, {pipeline_mode = #tpu.pipeline_mode<synchronous>, transform_indices = @transform_7, window_bounds = array<i64: 256, 512>}, {pipeline_mode = #tpu.pipeline_mode<synchronous>, transform_indices = @transform_8, window_bounds = array<i64: 1, 512>}, {pipeline_mode = #tpu.pipeline_mode<synchronous>, transform_indices = @transform_9, window_bounds = array<i64: 512, 128>}, {pipeline_mode = #tpu.pipeline_mode<synchronous>, transform_indices = @transform_10, window_bounds = array<i64: 1, 128>}, {transform_indices = @transform_11, window_bounds = array<i64: 128, 128>}]} {
    %c0 = arith.constant 0 : index
    %c0_0 = arith.constant 0 : index
    %0 = vector.load %arg1[%c0, %c0_0] : memref<128x128xbf16, #tpu.memory_space<vmem>>, vector<128x128xbf16>
    %c0_1 = arith.constant 0 : index
    %c0_2 = arith.constant 0 : index
    %1 = vector.load %arg2[%c0_1, %c0_2] : memref<128x128xbf16, #tpu.memory_space<vmem>>, vector<128x128xbf16>
    %cst = arith.constant dense<0.000000e+00> : vector<128x128xf32>
    %2 = tpu.matmul %0, %1, %cst {dimension_numbers = #tpu.dot_dimension_numbers<[1], [0], [0], [1], [0, 0, 1, 1], [], []>} : vector<128x128xbf16>, vector<128x128xbf16>, vector<128x128xf32> -> vector<128x128xf32>
    %c0_3 = arith.constant 0 : index
    %c0_4 = arith.constant 0 : index
    %3 = vector.load %arg3[%c0_3, %c0_4] : memref<1x128xf32, #tpu.memory_space<vmem>>, vector<1x128xf32>
    %4 = vector.broadcast %3 : vector<1x128xf32> to vector<128x128xf32>
    %5 = arith.addf %2, %4 : vector<128x128xf32>
    %cst_5 = arith.constant 0.000000e+00 : f32
    %6 = vector.broadcast %cst_5 : f32 to vector<128x128xf32>
    %7 = arith.maximumf %5, %6 : vector<128x128xf32>
    %8 = arith.truncf %7 : vector<128x128xf32> to vector<128x128xbf16>
    %c0_6 = arith.constant 0 : index
    %c0_7 = arith.constant 0 : index
    %9 = vector.load %arg4[%c0_6, %c0_7] : memref<128x128xbf16, #tpu.memory_space<vmem>>, vector<128x128xbf16>
    %cst_8 = arith.constant dense<0.000000e+00> : vector<128x128xf32>
    %10 = tpu.matmul %8, %9, %cst_8 {dimension_numbers = #tpu.dot_dimension_numbers<[1], [0], [0], [1], [0, 0, 1, 1], [], []>} : vector<128x128xbf16>, vector<128x128xbf16>, vector<128x128xf32> -> vector<128x128xf32>
    %c0_9 = arith.constant 0 : index
    %c0_10 = arith.constant 0 : index
    %11 = vector.load %arg5[%c0_9, %c0_10] : memref<1x128xf32, #tpu.memory_space<vmem>>, vector<1x128xf32>
    %12 = vector.broadcast %11 : vector<1x128xf32> to vector<128x128xf32>
    %13 = arith.addf %10, %12 : vector<128x128xf32>
    %cst_11 = arith.constant 0.000000e+00 : f32
    %14 = vector.broadcast %cst_11 : f32 to vector<128x128xf32>
    %15 = arith.maximumf %13, %14 : vector<128x128xf32>
    %16 = arith.truncf %15 : vector<128x128xf32> to vector<128x128xbf16>
    %c0_12 = arith.constant 0 : index
    %c0_13 = arith.constant 0 : index
    %17 = vector.load %arg6[%c0_12, %c0_13] : memref<128x256xbf16, #tpu.memory_space<vmem>>, vector<128x256xbf16>
    %cst_14 = arith.constant dense<0.000000e+00> : vector<128x256xf32>
    %18 = tpu.matmul %16, %17, %cst_14 {dimension_numbers = #tpu.dot_dimension_numbers<[1], [0], [0], [1], [0, 0, 1, 1], [], []>} : vector<128x128xbf16>, vector<128x256xbf16>, vector<128x256xf32> -> vector<128x256xf32>
    %c0_15 = arith.constant 0 : index
    %c0_16 = arith.constant 0 : index
    %19 = vector.load %arg7[%c0_15, %c0_16] : memref<1x256xf32, #tpu.memory_space<vmem>>, vector<1x256xf32>
    %20 = vector.broadcast %19 : vector<1x256xf32> to vector<128x256xf32>
    %21 = arith.addf %18, %20 : vector<128x256xf32>
    %cst_17 = arith.constant 0.000000e+00 : f32
    %22 = vector.broadcast %cst_17 : f32 to vector<128x256xf32>
    %23 = arith.maximumf %21, %22 : vector<128x256xf32>
    %24 = arith.truncf %23 : vector<128x256xf32> to vector<128x256xbf16>
    %c0_18 = arith.constant 0 : index
    %c0_19 = arith.constant 0 : index
    %25 = vector.load %arg8[%c0_18, %c0_19] : memref<256x512xbf16, #tpu.memory_space<vmem>>, vector<256x512xbf16>
    %cst_20 = arith.constant dense<0.000000e+00> : vector<128x512xf32>
    %26 = tpu.matmul %24, %25, %cst_20 {dimension_numbers = #tpu.dot_dimension_numbers<[1], [0], [0], [1], [0, 0, 1, 1], [], []>} : vector<128x256xbf16>, vector<256x512xbf16>, vector<128x512xf32> -> vector<128x512xf32>
    %c0_21 = arith.constant 0 : index
    %c0_22 = arith.constant 0 : index
    %27 = vector.load %arg9[%c0_21, %c0_22] : memref<1x512xf32, #tpu.memory_space<vmem>>, vector<1x512xf32>
    %28 = vector.broadcast %27 : vector<1x512xf32> to vector<128x512xf32>
    %29 = arith.addf %26, %28 : vector<128x512xf32>
    %cst_23 = arith.constant 0.000000e+00 : f32
    %30 = vector.broadcast %cst_23 : f32 to vector<128x512xf32>
    %31 = arith.maximumf %29, %30 : vector<128x512xf32>
    %32 = arith.truncf %31 : vector<128x512xf32> to vector<128x512xbf16>
    %c0_24 = arith.constant 0 : index
    %c0_25 = arith.constant 0 : index
    %33 = vector.load %arg10[%c0_24, %c0_25] : memref<512x128xbf16, #tpu.memory_space<vmem>>, vector<512x128xbf16>
    %cst_26 = arith.constant dense<0.000000e+00> : vector<128x128xf32>
    %34 = tpu.matmul %32, %33, %cst_26 {dimension_numbers = #tpu.dot_dimension_numbers<[1], [0], [0], [1], [0, 0, 1, 1], [], []>} : vector<128x512xbf16>, vector<512x128xbf16>, vector<128x128xf32> -> vector<128x128xf32>
    %c0_27 = arith.constant 0 : index
    %c0_28 = arith.constant 0 : index
    %35 = vector.load %arg11[%c0_27, %c0_28] : memref<1x128xf32, #tpu.memory_space<vmem>>, vector<1x128xf32>
    %36 = vector.broadcast %35 : vector<1x128xf32> to vector<128x128xf32>
    %37 = arith.addf %34, %36 : vector<128x128xf32>
    %cst_29 = arith.constant 0.000000e+00 : f32
    %38 = vector.broadcast %cst_29 : f32 to vector<128x128xf32>
    %39 = arith.maximumf %37, %38 : vector<128x128xf32>
    %c0_30 = arith.constant 0 : index
    %c0_31 = arith.constant 0 : index
    %40 = vector.load %arg12[%c0_30, %c0_31] : memref<128x128xf32, #tpu.memory_space<vmem>>, vector<128x128xf32>
    tpu.vector_store %arg12[%c0_30, %c0_31], %39 {strides = array<i32>} : memref<128x128xf32, #tpu.memory_space<vmem>>, vector<128x128xf32>,
    return
  }
  func.func @transform_0(%arg0: i32) -> (i32, i32) {
    %c0_i32 = arith.constant 0 : i32
    %c0_i32_0 = arith.constant 0 : i32
    return %arg0, %c0_i32 : i32, i32
  }
  func.func @transform_1(%arg0: i32) -> (i32, i32) {
    %c0_i32 = arith.constant 0 : i32
    %c0_i32_0 = arith.constant 0 : i32
    %c0_i32_1 = arith.constant 0 : i32
    return %c0_i32, %c0_i32_0 : i32, i32
  }
  func.func @transform_2(%arg0: i32) -> (i32, i32) {
    %c0_i32 = arith.constant 0 : i32
    %c0_i32_0 = arith.constant 0 : i32
    %c0_i32_1 = arith.constant 0 : i32
    return %c0_i32, %c0_i32_0 : i32, i32
  }
  func.func @transform_3(%arg0: i32) -> (i32, i32) {
    %c0_i32 = arith.constant 0 : i32
    %c0_i32_0 = arith.constant 0 : i32
    %c0_i32_1 = arith.constant 0 : i32
    return %c0_i32, %c0_i32_0 : i32, i32
  }
  func.func @transform_4(%arg0: i32) -> (i32, i32) {
    %c0_i32 = arith.constant 0 : i32
    %c0_i32_0 = arith.constant 0 : i32
    %c0_i32_1 = arith.constant 0 : i32
    return %c0_i32, %c0_i32_0 : i32, i32
  }
  func.func @transform_5(%arg0: i32) -> (i32, i32) {
    %c0_i32 = arith.constant 0 : i32
    %c0_i32_0 = arith.constant 0 : i32
    %c0_i32_1 = arith.constant 0 : i32
    return %c0_i32, %c0_i32_0 : i32, i32
  }
  func.func @transform_6(%arg0: i32) -> (i32, i32) {
    %c0_i32 = arith.constant 0 : i32
    %c0_i32_0 = arith.constant 0 : i32
    %c0_i32_1 = arith.constant 0 : i32
    return %c0_i32, %c0_i32_0 : i32, i32
  }
  func.func @transform_7(%arg0: i32) -> (i32, i32) {
    %c0_i32 = arith.constant 0 : i32
    %c0_i32_0 = arith.constant 0 : i32
    %c0_i32_1 = arith.constant 0 : i32
    return %c0_i32, %c0_i32_0 : i32, i32
  }
  func.func @transform_8(%arg0: i32) -> (i32, i32) {
    %c0_i32 = arith.constant 0 : i32
    %c0_i32_0 = arith.constant 0 : i32
    %c0_i32_1 = arith.constant 0 : i32
    return %c0_i32, %c0_i32_0 : i32, i32
  }
  func.func @transform_9(%arg0: i32) -> (i32, i32) {
    %c0_i32 = arith.constant 0 : i32
    %c0_i32_0 = arith.constant 0 : i32
    %c0_i32_1 = arith.constant 0 : i32
    return %c0_i32, %c0_i32_0 : i32, i32
  }
  func.func @transform_10(%arg0: i32) -> (i32, i32) {
    %c0_i32 = arith.constant 0 : i32
    %c0_i32_0 = arith.constant 0 : i32
    %c0_i32_1 = arith.constant 0 : i32
    return %c0_i32, %c0_i32_0 : i32, i32
  }
  func.func @transform_11(%arg0: i32) -> (i32, i32) {
    %c0_i32 = arith.constant 0 : i32
    %c0_i32_0 = arith.constant 0 : i32
    return %arg0, %c0_i32 : i32, i32
  }
}

</mosaic_0001>

<llo_original>
// kernel: _forward_jit.1
$region0: #{_forward_jit.1}
  #allocation0 [shape = 'u32[]', space=smem, size = 0x4, offset = 0x4, fixed_abs, tag = 'smem constant byte address 0x4 - core index']
  #allocation1 [shape = 'u32[72,128]{1,0:T(1,128)}', space=vmem, size = 0x9000, scoped, tag = 'internal scratch']
  %s0 = inlined_call_operand.vmem [shape: bf16[256,128], index: 0, kind: input, shape index: {}]
  %s1 = inlined_call_operand.hbm [shape: bf16[128,128], index: 1, kind: input, shape index: {}]
  %s2 = inlined_call_operand.vmem [shape: f32[1,128], index: 2, kind: input, shape index: {}]
  %s3 = inlined_call_operand.hbm [shape: bf16[128,128], index: 3, kind: input, shape index: {}]
  %s4 = inlined_call_operand.vmem [shape: f32[1,128], index: 4, kind: input, shape index: {}]
  %s5 = inlined_call_operand.vmem [shape: bf16[128,256], index: 5, kind: input, shape index: {}]
  %s6 = inlined_call_operand.vmem [shape: f32[1,256], index: 6, kind: input, shape index: {}]
  %s7 = inlined_call_operand.hbm [shape: bf16[256,512], index: 7, kind: input, shape index: {}]
  %s8 = inlined_call_operand.vmem [shape: f32[1,512], index: 8, kind: input, shape index: {}]
  %s9 = inlined_call_operand.hbm [shape: bf16[512,128], index: 9, kind: input, shape index: {}]
  %s10 = inlined_call_operand.vmem [shape: f32[1,128], index: 10, kind: input, shape index: {}]
  %s11 = inlined_call_operand.vmem [shape: f32[256,128], index: 11, kind: output, shape index: {}]
  %s12 = sld [smem:[#allocation0]]
  $region93: #{_forward_jit.1} parent=0
    _
  %s14 = ssub.s32 1, %s12
  %s15 = scalar_select 0, %s14, %s12
  $region1: #{_forward_jit.1} parent=0
    #allocation2 [shape = 'u8[32768]{0}', space=vmem, size = 0x8000, scoped, tag = 'input window, operand 1, single buffered']
    #allocation3 [shape = 's32[2]{0}', space=sflag, size = 0x8, scoped, tag = 'scoped memory for _forward_jit.1']
    #allocation4 [shape = 'u8[32768]{0}', space=vmem, size = 0x8000, scoped, tag = 'input window, operand 3, single buffered']
    #allocation5 [shape = 's32[1]{0}', space=sflag, size = 0x4, scoped, tag = 'scoped memory for _forward_jit.1']
    #allocation6 [shape = 'u8[262144]{0}', space=vmem, size = 0x40000, scoped, tag = 'input window, operand 7, single buffered']
    #allocation7 [shape = 'u8[131072]{0}', space=vmem, size = 0x20000, scoped, tag = 'input window, operand 9, single buffered']
    #allocation8 [shape = 's32[1]{0}', space=sflag, size = 0x4, scoped, tag = 'scoped memory for _forward_jit.1']
    %16 = vsyncpa [#allocation3], 0
    %17 = vsyncpa [#allocation5], 0
    %18 = vsyncpa [#allocation8], 0
    loop: start=0, step=1, limit=4
    $region2: #{_forward_jit.1} parent=1 // loop_pre_header
      _
    $region3: #{_forward_jit.1} parent=1 // loop_header
      %s20 = sphi 0, %s24
      %p21 = scmp.ge.s32.totalorder %s20, 4
      %s30 = sphi 0, %s32
      %s33 = sphi 0, %s30
      %s34 = sphi 0, %s33
      %s50 = sphi 0, %s34
      %s54 = sphi 0, %s54
      %s56 = sphi 0, %s54
      %s57 = sphi 0, %s56
      %s71 = sphi 0, %s57
      %s75 = sphi 0, %s75
      %s77 = sphi 0, %s75
      %s78 = sphi 0, %s77
      %s92 = sphi 0, %s78
      %s96 = sphi 0, %s96
      %s98 = sphi 0, %s96
      %s99 = sphi 0, %s98
      %s113 = sphi 0, %s99
      %s117 = sphi 0, %s117
      %s119 = sphi 0, %s117
      %s120 = sphi 0, %s119
      %s134 = sphi 0, %s120
      %s138 = sphi 0, %s138
      %s140 = sphi 0, %s138
      %s141 = sphi 0, %s140
      %s155 = sphi 0, %s141
      %s159 = sphi 0, %s159
      %s161 = sphi 0, %s159
      %s162 = sphi 0, %s161
      %s176 = sphi 0, %s162
      %s180 = sphi 0, %s180
      %s182 = sphi 0, %s180
      %s183 = sphi 0, %s182
      %s197 = sphi 0, %s183
      %s201 = sphi 0, %s201
      %s203 = sphi 0, %s201
      %s204 = sphi 0, %s203
      %s218 = sphi 0, %s204
      %s222 = sphi 0, %s222
      %s224 = sphi 0, %s222
      %s225 = sphi 0, %s224
      %s239 = sphi 0, %s225
      %s243 = sphi 0, %s243
      %s245 = sphi 0, %s243
      %s246 = sphi 0, %s245
      %s260 = sphi 0, %s246
      %s266 = sphi 0, %s268
      %s269 = sphi 0, %s266
      %s270 = sphi 0, %s269
      %s286 = sphi 0, %s270
    $region4: #{_forward_jit.1} parent=1 // loop_header_branch
      %23 = sbr.rel (%p21) target = $region8
    $region5: #{_forward_jit.1} parent=1 // loop_body
      %s25 = ssub.s32 %s20, 1
      %s26 = ssub.s32 %s20, 2
      %s27 = sadd.s32 %s20, 1
      %s28 = ssub.s32 %s20, %s27
      %p29 = scmp.eq.s32.totalorder %s28, 0
      %s31 = sadd.s32 %s30, 1
      %s32 = scalar_select %p29, %s30, %s31
      %p35 = pneg %p29
      %p36 = scmp.eq.s32.totalorder %s20, 1
      %p37 = por %p35, %p36
      %p38 = scmp.ne.s32.totalorder %s30, %s33
      %p39 = scmp.eq.s32.totalorder %s20, 0
      %p40 = por %p38, %p39
      %p41 = scmp.ne.s32.totalorder %s30, %s33
      %p42 = scmp.eq.s32.totalorder %s25, 1
      %p43 = por %p41, %p42
      %p44 = scmp.ne.s32.totalorder %s33, %s34
      %p45 = scmp.eq.s32.totalorder %s25, 0
      %p46 = por %p44, %p45
      %p47 = scmp.ne.s32.totalorder %s33, %s34
      %p48 = scmp.eq.s32.totalorder %s26, 1
      %p49 = por %p47, %p48
      %p51 = scmp.ne.s32.totalorder %s34, %s50
      %p52 = scmp.eq.s32.totalorder %s26, 0
      %p53 = por %p51, %p52
      %s55 = sadd.s32 %s54, 1
      %p58 = scmp.eq.s32.totalorder %s20, 1
      %p59 = scmp.ne.s32.totalorder %s54, %s56
      %p60 = scmp.eq.s32.totalorder %s20, 0
      %p61 = por %p59, %p60
      %p62 = scmp.ne.s32.totalorder %s54, %s56
      %p63 = scmp.eq.s32.totalorder %s25, 1
      %p64 = por %p62, %p63
      %p65 = scmp.ne.s32.totalorder %s56, %s57
      %p66 = scmp.eq.s32.totalorder %s25, 0
      %p67 = por %p65, %p66
      %p68 = scmp.ne.s32.totalorder %s56, %s57
      %p69 = scmp.eq.s32.totalorder %s26, 1
      %p70 = por %p68, %p69
      %p72 = scmp.ne.s32.totalorder %s57, %s71
      %p73 = scmp.eq.s32.totalorder %s26, 0
      %p74 = por %p72, %p73
      %s76 = sadd.s32 %s75, 1
      %p79 = scmp.eq.s32.totalorder %s20, 1
      %p80 = scmp.ne.s32.totalorder %s75, %s77
      %p81 = scmp.eq.s32.totalorder %s20, 0
      %p82 = por %p80, %p81
      %p83 = scmp.ne.s32.totalorder %s75, %s77
      %p84 = scmp.eq.s32.totalorder %s25, 1
      %p85 = por %p83, %p84
      %p86 = scmp.ne.s32.totalorder %s77, %s78
      %p87 = scmp.eq.s32.totalorder %s25, 0
      %p88 = por %p86, %p87
      %p89 = scmp.ne.s32.totalorder %s77, %s78
      %p90 = scmp.eq.s32.totalorder %s26, 1
      %p91 = por %p89, %p90
      %p93 = scmp.ne.s32.totalorder %s78, %s92
      %p94 = scmp.eq.s32.totalorder %s26, 0
      %p95 = por %p93, %p94
      %s97 = sadd.s32 %s96, 1
      %p100 = scmp.eq.s32.totalorder %s20, 1
      %p101 = scmp.ne.s32.totalorder %s96, %s98
      %p102 = scmp.eq.s32.totalorder %s20, 0
      %p103 = por %p101, %p102
      %p104 = scmp.ne.s32.totalorder %s96, %s98
      %p105 = scmp.eq.s32.totalorder %s25, 1
      %p106 = por %p104, %p105
      %p107 = scmp.ne.s32.totalorder %s98, %s99
      %p108 = scmp.eq.s32.totalorder %s25, 0
      %p109 = por %p107, %p108
      %p110 = scmp.ne.s32.totalorder %s98, %s99
      %p111 = scmp.eq.s32.totalorder %s26, 1
      %p112 = por %p110, %p111
      %p114 = scmp.ne.s32.totalorder %s99, %s113
      %p115 = scmp.eq.s32.totalorder %s26, 0
      %p116 = por %p114, %p115
      %s118 = sadd.s32 %s117, 1
      %p121 = scmp.eq.s32.totalorder %s20, 1
      %p122 = scmp.ne.s32.totalorder %s117, %s119
      %p123 = scmp.eq.s32.totalorder %s20, 0
      %p124 = por %p122, %p123
      %p125 = scmp.ne.s32.totalorder %s117, %s119
      %p126 = scmp.eq.s32.totalorder %s25, 1
      %p127 = por %p125, %p126
      %p128 = scmp.ne.s32.totalorder %s119, %s120
      %p129 = scmp.eq.s32.totalorder %s25, 0
      %p130 = por %p128, %p129
      %p131 = scmp.ne.s32.totalorder %s119, %s120
      %p132 = scmp.eq.s32.totalorder %s26, 1
      %p133 = por %p131, %p132
      %p135 = scmp.ne.s32.totalorder %s120, %s134
      %p136 = scmp.eq.s32.totalorder %s26, 0
      %p137 = por %p135, %p136
      %s139 = sadd.s32 %s138, 1
      %p142 = scmp.eq.s32.totalorder %s20, 1
      %p143 = scmp.ne.s32.totalorder %s138, %s140
      %p144 = scmp.eq.s32.totalorder %s20, 0
      %p145 = por %p143, %p144
      %p146 = scmp.ne.s32.totalorder %s138, %s140
      %p147 = scmp.eq.s32.totalorder %s25, 1
      %p148 = por %p146, %p147
      %p149 = scmp.ne.s32.totalorder %s140, %s141
      %p150 = scmp.eq.s32.totalorder %s25, 0
      %p151 = por %p149, %p150
      %p152 = scmp.ne.s32.totalorder %s140, %s141
      %p153 = scmp.eq.s32.totalorder %s26, 1
      %p154 = por %p152, %p153
      %p156 = scmp.ne.s32.totalorder %s141, %s155
      %p157 = scmp.eq.s32.totalorder %s26, 0
      %p158 = por %p156, %p157
      %s160 = sadd.s32 %s159, 1
      %p163 = scmp.eq.s32.totalorder %s20, 1
      %p164 = scmp.ne.s32.totalorder %s159, %s161
      %p165 = scmp.eq.s32.totalorder %s20, 0
      %p166 = por %p164, %p165
      %p167 = scmp.ne.s32.totalorder %s159, %s161
      %p168 = scmp.eq.s32.totalorder %s25, 1
      %p169 = por %p167, %p168
      %p170 = scmp.ne.s32.totalorder %s161, %s162
      %p171 = scmp.eq.s32.totalorder %s25, 0
      %p172 = por %p170, %p171
      %p173 = scmp.ne.s32.totalorder %s161, %s162
      %p174 = scmp.eq.s32.totalorder %s26, 1
      %p175 = por %p173, %p174
      %p177 = scmp.ne.s32.totalorder %s162, %s176
      %p178 = scmp.eq.s32.totalorder %s26, 0
      %p179 = por %p177, %p178
      %s181 = sadd.s32 %s180, 1
      %p184 = scmp.eq.s32.totalorder %s20, 1
      %p185 = scmp.ne.s32.totalorder %s180, %s182
      %p186 = scmp.eq.s32.totalorder %s20, 0
      %p187 = por %p185, %p186
      %p188 = scmp.ne.s32.totalorder %s180, %s182
      %p189 = scmp.eq.s32.totalorder %s25, 1
      %p190 = por %p188, %p189
      %p191 = scmp.ne.s32.totalorder %s182, %s183
      %p192 = scmp.eq.s32.totalorder %s25, 0
      %p193 = por %p191, %p192
      %p194 = scmp.ne.s32.totalorder %s182, %s183
      %p195 = scmp.eq.s32.totalorder %s26, 1
      %p196 = por %p194, %p195
      %p198 = scmp.ne.s32.totalorder %s183, %s197
      %p199 = scmp.eq.s32.totalorder %s26, 0
      %p200 = por %p198, %p199
      %s202 = sadd.s32 %s201, 1
      %p205 = scmp.eq.s32.totalorder %s20, 1
      %p206 = scmp.ne.s32.totalorder %s201, %s203
      %p207 = scmp.eq.s32.totalorder %s20, 0
      %p208 = por %p206, %p207
      %p209 = scmp.ne.s32.totalorder %s201, %s203
      %p210 = scmp.eq.s32.totalorder %s25, 1
      %p211 = por %p209, %p210
      %p212 = scmp.ne.s32.totalorder %s203, %s204
      %p213 = scmp.eq.s32.totalorder %s25, 0
      %p214 = por %p212, %p213
      %p215 = scmp.ne.s32.totalorder %s203, %s204
      %p216 = scmp.eq.s32.totalorder %s26, 1
      %p217 = por %p215, %p216
      %p219 = scmp.ne.s32.totalorder %s204, %s218
      %p220 = scmp.eq.s32.totalorder %s26, 0
      %p221 = por %p219, %p220
      %s223 = sadd.s32 %s222, 1
      %p226 = scmp.eq.s32.totalorder %s20, 1
      %p227 = scmp.ne.s32.totalorder %s222, %s224
      %p228 = scmp.eq.s32.totalorder %s20, 0
      %p229 = por %p227, %p228
      %p230 = scmp.ne.s32.totalorder %s222, %s224
      %p231 = scmp.eq.s32.totalorder %s25, 1
      %p232 = por %p230, %p231
      %p233 = scmp.ne.s32.totalorder %s224, %s225
      %p234 = scmp.eq.s32.totalorder %s25, 0
      %p235 = por %p233, %p234
      %p236 = scmp.ne.s32.totalorder %s224, %s225
      %p237 = scmp.eq.s32.totalorder %s26, 1
      %p238 = por %p236, %p237
      %p240 = scmp.ne.s32.totalorder %s225, %s239
      %p241 = scmp.eq.s32.totalorder %s26, 0
      %p242 = por %p240, %p241
      %s244 = sadd.s32 %s243, 1
      %p247 = scmp.eq.s32.totalorder %s20, 1
      %p248 = scmp.ne.s32.totalorder %s243, %s245
      %p249 = scmp.eq.s32.totalorder %s20, 0
      %p250 = por %p248, %p249
      %p251 = scmp.ne.s32.totalorder %s243, %s245
      %p252 = scmp.eq.s32.totalorder %s25, 1
      %p253 = por %p251, %p252
      %p254 = scmp.ne.s32.totalorder %s245, %s246
      %p255 = scmp.eq.s32.totalorder %s25, 0
      %p256 = por %p254, %p255
      %p257 = scmp.ne.s32.totalorder %s245, %s246
      %p258 = scmp.eq.s32.totalorder %s26, 1
      %p259 = por %p257, %p258
      %p261 = scmp.ne.s32.totalorder %s246, %s260
      %p262 = scmp.eq.s32.totalorder %s26, 0
      %p263 = por %p261, %p262
      %s264 = ssub.s32 %s20, %s27
      %p265 = scmp.eq.s32.totalorder %s264, 0
      %s267 = sadd.s32 %s266, 1
      %s268 = scalar_select %p265, %s266, %s267
      %p271 = pneg %p265
      %p272 = scmp.eq.s32.totalorder %s20, 1
      %p273 = por %p271, %p272
      %p274 = scmp.ne.s32.totalorder %s266, %s269
      %p275 = scmp.eq.s32.totalorder %s20, 0
      %p276 = por %p274, %p275
      %p277 = scmp.ne.s32.totalorder %s266, %s269
      %p278 = scmp.eq.s32.totalorder %s25, 1
      %p279 = por %p277, %p278
      %p280 = scmp.ne.s32.totalorder %s269, %s270
      %p281 = scmp.eq.s32.totalorder %s25, 0
      %p282 = por %p280, %p281
      %p283 = scmp.ne.s32.totalorder %s269, %s270
      %p284 = scmp.eq.s32.totalorder %s26, 1
      %p285 = por %p283, %p284
      %p287 = scmp.ne.s32.totalorder %s270, %s286
      %p288 = scmp.eq.s32.totalorder %s26, 0
      %p289 = por %p287, %p288
      %p290 = scmp.le.s32.totalorder 1, %s20
      %p291 = scmp.lt.s32.totalorder %s20, 3
      %p292 = pnand %p290, %p291
      %p293 = pneg %p292
      // Predicated region
      $region9: #{_forward_jit.1} parent=5 // pred_check
        _
      $region10: #{_forward_jit.1} parent=5 // pred_check_branch
        %295 = sbr.rel (%p292) target = $region12
      $region11: #{_forward_jit.1} parent=5 // pred_region
        %s296 = ssub.s32 %s20, 1
        // Predicated region
        $region13: #{_forward_jit.1} parent=11 // pred_check
          %p297 = pneg %p67
        $region14: #{_forward_jit.1} parent=11 // pred_check_branch
          %299 = sbr.rel (%p297) target = $region16
        $region15: #{_forward_jit.1} parent=11 // pred_region
          %301 = vsyncadd [#allocation3], 0
          %s302 = sshll.u32 %s1, 4
          %s303 = int_to_ptr.hbm [resolvable:$true] %s302
          %s304 = sshll.u32 [#allocation2], 4
          %s305 = int_to_ptr.vmem [resolvable:$true] %s304
          %310 = dma.hbm_to_vmem [thread:$0]  %s303, 1024, %s305, [#allocation3], 64, 64, 4
        $region16: #{_forward_jit.1} parent=11 // pred_fallthru
          _
        // Predicated region
        $region17: #{_forward_jit.1} parent=11 // pred_check
          %p311 = pneg %p88
        $region18: #{_forward_jit.1} parent=11 // pred_check_branch
          %313 = sbr.rel (%p311) target = $region20
        $region19: #{_forward_jit.1} parent=11 // pred_region
          _
        $region20: #{_forward_jit.1} parent=11 // pred_fallthru
          _
        // Predicated region
        $region21: #{_forward_jit.1} parent=11 // pred_check
          %p314 = pneg %p109
        $region22: #{_forward_jit.1} parent=11 // pred_check_branch
          %316 = sbr.rel (%p314) target = $region24
        $region23: #{_forward_jit.1} parent=11 // pred_region
          %318 = vsyncadd [#allocation5], 0
          %s319 = sshll.u32 %s3, 4
          %s320 = int_to_ptr.hbm [resolvable:$true] %s319
          %s321 = sshll.u32 [#allocation4], 4
          %s322 = int_to_ptr.vmem [resolvable:$true] %s321
          %327 = dma.hbm_to_vmem [thread:$0]  %s320, 1024, %s322, [#allocation5], 64, 64, 4
        $region24: #{_forward_jit.1} parent=11 // pred_fallthru
          _
        // Predicated region
        $region25: #{_forward_jit.1} parent=11 // pred_check
          %p328 = pneg %p130
        $region26: #{_forward_jit.1} parent=11 // pred_check_branch
          %330 = sbr.rel (%p328) target = $region28
        $region27: #{_forward_jit.1} parent=11 // pred_region
          _
        $region28: #{_forward_jit.1} parent=11 // pred_fallthru
          _
        // Predicated region
        $region29: #{_forward_jit.1} parent=11 // pred_check
          %p331 = pneg %p151
        $region30: #{_forward_jit.1} parent=11 // pred_check_branch
          %333 = sbr.rel (%p331) target = $region32
        $region31: #{_forward_jit.1} parent=11 // pred_region
          _
        $region32: #{_forward_jit.1} parent=11 // pred_fallthru
          _
        // Predicated region
        $region33: #{_forward_jit.1} parent=11 // pred_check
          %p334 = pneg %p172
        $region34: #{_forward_jit.1} parent=11 // pred_check_branch
          %336 = sbr.rel (%p334) target = $region36
        $region35: #{_forward_jit.1} parent=11 // pred_region
          _
        $region36: #{_forward_jit.1} parent=11 // pred_fallthru
          _
        // Predicated region
        $region37: #{_forward_jit.1} parent=11 // pred_check
          %p337 = pneg %p193
        $region38: #{_forward_jit.1} parent=11 // pred_check_branch
          %339 = sbr.rel (%p337) target = $region40
        $region39: #{_forward_jit.1} parent=11 // pred_region
          %341 = vsyncadd [#allocation5], 0
          %s342 = sshll.u32 %s7, 4
          %s343 = int_to_ptr.hbm [resolvable:$true] %s342
          %s344 = sshll.u32 [#allocation6], 4
          %s345 = int_to_ptr.vmem [resolvable:$true] %s344
          %350 = dma.hbm_to_vmem [thread:$0]  %s343, 8192, %s345, [#allocation5], 256, 256, 16
        $region40: #{_forward_jit.1} parent=11 // pred_fallthru
          _
        // Predicated region
        $region41: #{_forward_jit.1} parent=11 // pred_check
          %p351 = pneg %p214
        $region42: #{_forward_jit.1} parent=11 // pred_check_branch
          %353 = sbr.rel (%p351) target = $region44
        $region43: #{_forward_jit.1} parent=11 // pred_region
          _
        $region44: #{_forward_jit.1} parent=11 // pred_fallthru
          _
        // Predicated region
        $region45: #{_forward_jit.1} parent=11 // pred_check
          %p354 = pneg %p235
        $region46: #{_forward_jit.1} parent=11 // pred_check_branch
          %356 = sbr.rel (%p354) target = $region48
        $region47: #{_forward_jit.1} parent=11 // pred_region
          %358 = vsyncadd [#allocation8], 0
          %s359 = sshll.u32 %s9, 4
          %s360 = int_to_ptr.hbm [resolvable:$true] %s359
          %s361 = sshll.u32 [#allocation7], 4
          %s362 = int_to_ptr.vmem [resolvable:$true] %s361
          %367 = dma.hbm_to_vmem [thread:$0]  %s360, 4096, %s362, [#allocation8], 64, 64, 4
        $region48: #{_forward_jit.1} parent=11 // pred_fallthru
          _
        // Predicated region
        $region49: #{_forward_jit.1} parent=11 // pred_check
          %p368 = pneg %p256
        $region50: #{_forward_jit.1} parent=11 // pred_check_branch
          %370 = sbr.rel (%p368) target = $region52
        $region51: #{_forward_jit.1} parent=11 // pred_region
          _
        $region52: #{_forward_jit.1} parent=11 // pred_fallthru
          _
      $region12: #{_forward_jit.1} parent=5 // pred_fallthru
        _
      %p371 = scmp.lt.s32.totalorder %s20, 2
      // Predicated region
      $region53: #{_forward_jit.1} parent=5 // pred_check
        %p372 = pneg %p371
      $region54: #{_forward_jit.1} parent=5 // pred_check_branch
        %374 = sbr.rel (%p372) target = $region56
      $region55: #{_forward_jit.1} parent=5 // pred_region
        // Predicated region
        $region57: #{_forward_jit.1} parent=55 // pred_check
          %p375 = pneg %p40
        $region58: #{_forward_jit.1} parent=55 // pred_check_branch
          %377 = sbr.rel (%p375) target = $region60
        $region59: #{_forward_jit.1} parent=55 // pred_region
          %s378 = smul.u32 16, %s20
          %p379 = scmp.lt.s32.totalorder %s378, 31
          %s380 = scalar_select %p379, %s378, 31
          %s381 = smul.addr %s380, 4
          %s382 = scalar_lea.vmem %s0, %s381
          %s383 = smul.u32 16, %s20
        $region60: #{_forward_jit.1} parent=55 // pred_fallthru
          _
      $region56: #{_forward_jit.1} parent=5 // pred_fallthru
        _
      %p384 = scmp.le.s32.totalorder 1, %s20
      %p385 = scmp.lt.s32.totalorder %s20, 3
      %p386 = pnand %p384, %p385
      %p387 = pneg %p386
      // Predicated region
      $region61: #{_forward_jit.1} parent=5 // pred_check
        _
      $region62: #{_forward_jit.1} parent=5 // pred_check_branch
        %389 = sbr.rel (%p386) target = $region64
      $region63: #{_forward_jit.1} parent=5 // pred_region
        %s390 = ssub.s32 %s20, 1
        // Predicated region
        $region65: #{_forward_jit.1} parent=63 // pred_check
          %p391 = pneg %p67
        $region66: #{_forward_jit.1} parent=63 // pred_check_branch
          %393 = sbr.rel (%p391) target = $region68
        $region67: #{_forward_jit.1} parent=63 // pred_region
          %395 = dma.done [#allocation3], 1024
        $region68: #{_forward_jit.1} parent=63 // pred_fallthru
          _
        // Predicated region
        $region69: #{_forward_jit.1} parent=63 // pred_check
          %p396 = pneg %p109
        $region70: #{_forward_jit.1} parent=63 // pred_check_branch
          %398 = sbr.rel (%p396) target = $region72
        $region71: #{_forward_jit.1} parent=63 // pred_region
          %400 = dma.done [#allocation5], 1024
        $region72: #{_forward_jit.1} parent=63 // pred_fallthru
          _
        // Predicated region
        $region73: #{_forward_jit.1} parent=63 // pred_check
          %p401 = pneg %p193
        $region74: #{_forward_jit.1} parent=63 // pred_check_branch
          %403 = sbr.rel (%p401) target = $region76
        $region75: #{_forward_jit.1} parent=63 // pred_region
          %405 = dma.done [#allocation5], 8192
        $region76: #{_forward_jit.1} parent=63 // pred_fallthru
          _
        // Predicated region
        $region77: #{_forward_jit.1} parent=63 // pred_check
          %p406 = pneg %p235
        $region78: #{_forward_jit.1} parent=63 // pred_check_branch
          %408 = sbr.rel (%p406) target = $region80
        $region79: #{_forward_jit.1} parent=63 // pred_region
          %410 = dma.done [#allocation8], 4096
        $region80: #{_forward_jit.1} parent=63 // pred_fallthru
          _
        %s411 = smul.u32 16, %s25
        %p412 = scmp.lt.s32.totalorder %s411, 31
        %s413 = scalar_select %p412, %s411, 31
        %s414 = smul.addr %s413, 4
        %s415 = scalar_lea.vmem %s0, %s414
        %p416 = pneg %p46
        %p417 = pneg %p43
        %p418 = pneg %p67
        %p419 = pneg %p64
        %p420 = pneg %p88
        %p421 = pneg %p85
        %p422 = pneg %p109
        %p423 = pneg %p106
        %p424 = pneg %p130
        %p425 = pneg %p127
        %p426 = pneg %p151
        %p427 = pneg %p148
        %p428 = pneg %p172
        %p429 = pneg %p169
        %p430 = pneg %p193
        %p431 = pneg %p190
        %p432 = pneg %p214
        %p433 = pneg %p211
        %p434 = pneg %p235
        %p435 = pneg %p232
        %p436 = pneg %p256
        %p437 = pneg %p253
        %p438 = pneg %p282
        %p439 = pneg %p279
        %s440 = smul.u32 16, %s25
        %p441 = scmp.lt.s32.totalorder %s440, 31
        %s442 = scalar_select %p441, %s440, 31
        %s443 = smul.addr %s442, 8
        %s444 = scalar_lea.vmem %s11, %s443
        %s445 = smul.u32 16, %s25
        %p446 = scmp.lt.s32.totalorder %s445, 31
        %s447 = scalar_select %p446, %s445, 31
        %s448 = smul.addr %s447, 4
        %s449 = scalar_lea.vmem %s0, %s448
        %s450 = smul.u32 16, %s25
        %s451 = smul.u32 16, %s25
        %p452 = scmp.lt.s32.totalorder %s451, 31
        %s453 = scalar_select %p452, %s451, 31
        %s454 = smul.addr %s453, 8
        %s455 = scalar_lea.vmem %s11, %s454
        %s456 = smul.u32 16, %s25
        %v457 = vld [vmem:[%s449] sm:$0xf]
        %v458 = vld [vmem:[%s449 + $0x4] sm:$0xf]
        %v459 = vld [vmem:[%s449 + $0x8] sm:$0xf]
        %v460 = vld [vmem:[%s449 + $0xc] sm:$0xf]
        %v461 = vld [vmem:[%s449 + $0x10] sm:$0xf]
        %v462 = vld [vmem:[%s449 + $0x14] sm:$0xf]
        %v463 = vld [vmem:[%s449 + $0x18] sm:$0xf]
        %v464 = vld [vmem:[%s449 + $0x1c] sm:$0xf]
        %v465 = vld [vmem:[%s449 + $0x20] sm:$0xf]
        %v466 = vld [vmem:[%s449 + $0x24] sm:$0xf]
        %v467 = vld [vmem:[%s449 + $0x28] sm:$0xf]
        %v468 = vld [vmem:[%s449 + $0x2c] sm:$0xf]
        %v469 = vld [vmem:[%s449 + $0x30] sm:$0xf]
        %v470 = vld [vmem:[%s449 + $0x34] sm:$0xf]
        %v471 = vld [vmem:[%s449 + $0x38] sm:$0xf]
        %v472 = vld [vmem:[%s449 + $0x3c] sm:$0xf]
        %v473 = vld [vmem:[#allocation2] sm:$0xf]
        %v474 = vld [vmem:[#allocation2 + $0x4] sm:$0xf]
        %v475 = vld [vmem:[#allocation2 + $0x8] sm:$0xf]
        %v476 = vld [vmem:[#allocation2 + $0xc] sm:$0xf]
        %v477 = vld [vmem:[#allocation2 + $0x10] sm:$0xf]
        %v478 = vld [vmem:[#allocation2 + $0x14] sm:$0xf]
        %v479 = vld [vmem:[#allocation2 + $0x18] sm:$0xf]
        %v480 = vld [vmem:[#allocation2 + $0x1c] sm:$0xf]
        %v481 = vld [vmem:[#allocation2 + $0x20] sm:$0xf]
        %v482 = vld [vmem:[#allocation2 + $0x24] sm:$0xf]
        %v483 = vld [vmem:[#allocation2 + $0x28] sm:$0xf]
        %v484 = vld [vmem:[#allocation2 + $0x2c] sm:$0xf]
        %v485 = vld [vmem:[#allocation2 + $0x30] sm:$0xf]
        %v486 = vld [vmem:[#allocation2 + $0x34] sm:$0xf]
        %v487 = vld [vmem:[#allocation2 + $0x38] sm:$0xf]
        %v488 = vld [vmem:[#allocation2 + $0x3c] sm:$0xf]
        %v489 = vld [vmem:[%s2] sm:$0x1]
        %v491 = vperm.slane %v489, 0
        %v509 = vunpack.c.l.b16 %v457
        %v510 = vunpack.c.l.b16 %v458
        %v511 = vunpack.c.l.b16 %v459
        %v512 = vunpack.c.l.b16 %v460
        %v513 = vunpack.c.l.b16 %v461
        %v514 = vunpack.c.l.b16 %v462
        %v515 = vunpack.c.l.b16 %v463
        %v516 = vunpack.c.l.b16 %v464
        %v517 = vunpack.c.l.b16 %v465
        %v518 = vunpack.c.l.b16 %v466
        %v519 = vunpack.c.l.b16 %v467
        %v520 = vunpack.c.l.b16 %v468
        %v521 = vunpack.c.l.b16 %v469
        %v522 = vunpack.c.l.b16 %v470
        %v523 = vunpack.c.l.b16 %v471
        %v524 = vunpack.c.l.b16 %v472
        %v525 = vpack.c.b16 %v510, %v509
        %v526 = vpack.c.b16 %v512, %v511
        %v527 = vpack.c.b16 %v514, %v513
        %v528 = vpack.c.b16 %v516, %v515
        %v529 = vpack.c.b16 %v518, %v517
        %v530 = vpack.c.b16 %v520, %v519
        %v531 = vpack.c.b16 %v522, %v521
        %v532 = vpack.c.b16 %v524, %v523
        %v557 = vunpack.c.l.b16 %v473
        %v558 = vunpack.c.l.b16 %v474
        %v559 = vunpack.c.l.b16 %v475
        %v560 = vunpack.c.l.b16 %v476
        %v561 = vunpack.c.l.b16 %v477
        %v562 = vunpack.c.l.b16 %v478
        %v563 = vunpack.c.l.b16 %v479
        %v564 = vunpack.c.l.b16 %v480
        %v565 = vunpack.c.l.b16 %v481
        %v566 = vunpack.c.l.b16 %v482
        %v567 = vunpack.c.l.b16 %v483
        %v568 = vunpack.c.l.b16 %v484
        %v569 = vunpack.c.l.b16 %v485
        %v570 = vunpack.c.l.b16 %v486
        %v571 = vunpack.c.l.b16 %v487
        %v572 = vunpack.c.l.b16 %v488
        %v573 = vpack.c.b16 %v558, %v557
        %v574 = vpack.c.b16 %v560, %v559
        %v575 = vpack.c.b16 %v562, %v561
        %v576 = vpack.c.b16 %v564, %v563
        %v577 = vpack.c.b16 %v566, %v565
        %v578 = vpack.c.b16 %v568, %v567
        %v579 = vpack.c.b16 %v570, %v569
        %v580 = vpack.c.b16 %v572, %v571
        %589 = vmatpush.bf16.msra.mxu0 %v580
        %590 = vmatpush.bf16.msra.mxu0 %v579
        %591 = vmatpush.bf16.msra.mxu0 %v578
        %592 = vmatpush.bf16.msra.mxu0 %v577
        %593 = vmatpush.bf16.msra.mxu0 %v576
        %594 = vmatpush.bf16.msra.mxu0 %v575
        %595 = vmatpush.bf16.msra.mxu0 %v574
        %596 = vmatpush.bf16.msra.mxu0 %v573
        %597 = vmatmul.bf16.gmra.mxu0 %v525
        %v598 = vpop.f32.mrf.mxu0
        %v599 = vadd.f32 %v491, %v598
        %v600 = vpop.f32.mrf.mxu0
        %v601 = vadd.f32 %v491, %v600
        %602 = vmatmul.bf16.gmra.mxu0 %v526
        %v603 = vpop.f32.mrf.mxu0
        %v604 = vadd.f32 %v491, %v603
        %v605 = vpop.f32.mrf.mxu0
        %v606 = vadd.f32 %v491, %v605
        %607 = vmatmul.bf16.gmra.mxu0 %v527
        %v608 = vpop.f32.mrf.mxu0
        %v609 = vadd.f32 %v491, %v608
        %v610 = vpop.f32.mrf.mxu0
        %v611 = vadd.f32 %v491, %v610
        %612 = vmatmul.bf16.gmra.mxu0 %v528
        %v613 = vpop.f32.mrf.mxu0
        %v614 = vadd.f32 %v491, %v613
        %v615 = vpop.f32.mrf.mxu0
        %v616 = vadd.f32 %v491, %v615
        %617 = vmatmul.bf16.gmra.mxu0 %v529
        %v618 = vpop.f32.mrf.mxu0
        %v619 = vadd.f32 %v491, %v618
        %v620 = vpop.f32.mrf.mxu0
        %v621 = vadd.f32 %v491, %v620
        %622 = vmatmul.bf16.gmra.mxu0 %v530
        %v623 = vpop.f32.mrf.mxu0
        %v624 = vadd.f32 %v491, %v623
        %v625 = vpop.f32.mrf.mxu0
        %v626 = vadd.f32 %v491, %v625
        %627 = vmatmul.bf16.gmra.mxu0 %v531
        %v628 = vpop.f32.mrf.mxu0
        %v629 = vadd.f32 %v491, %v628
        %v630 = vpop.f32.mrf.mxu0
        %v631 = vadd.f32 %v491, %v630
        %632 = vmatmul.bf16.gmra.mxu0 %v532
        %v633 = vpop.f32.mrf.mxu0
        %v634 = vadd.f32 %v491, %v633
        %v635 = vpop.f32.mrf.mxu0
        %v636 = vadd.f32 %v491, %v635
        %637 = vdwg.mxu0
        %v638 = vmax.f32 %v599, 0.0
        %v639 = vmax.f32 %v601, 0.0
        %v640 = vmax.f32 %v604, 0.0
        %v641 = vmax.f32 %v606, 0.0
        %v642 = vmax.f32 %v609, 0.0
        %v643 = vmax.f32 %v611, 0.0
        %v644 = vmax.f32 %v614, 0.0
        %v645 = vmax.f32 %v616, 0.0
        %v646 = vmax.f32 %v619, 0.0
        %v647 = vmax.f32 %v621, 0.0
        %v648 = vmax.f32 %v624, 0.0
        %v649 = vmax.f32 %v626, 0.0
        %v650 = vmax.f32 %v629, 0.0
        %v651 = vmax.f32 %v631, 0.0
        %v652 = vmax.f32 %v634, 0.0
        %v653 = vmax.f32 %v636, 0.0
        %v654 = vpack.c.bf16 %v639, %v638
        %v655 = vpack.c.bf16 %v641, %v640
        %v656 = vpack.c.bf16 %v643, %v642
        %v657 = vpack.c.bf16 %v645, %v644
        %v658 = vpack.c.bf16 %v647, %v646
        %v659 = vpack.c.bf16 %v649, %v648
        %v660 = vpack.c.bf16 %v651, %v650
        %v661 = vpack.c.bf16 %v653, %v652
        %v662 = vld [vmem:[#allocation4] sm:$0xf]
        %v663 = vld [vmem:[#allocation4 + $0x4] sm:$0xf]
        %v664 = vld [vmem:[#allocation4 + $0x8] sm:$0xf]
        %v665 = vld [vmem:[#allocation4 + $0xc] sm:$0xf]
        %v666 = vld [vmem:[#allocation4 + $0x10] sm:$0xf]
        %v667 = vld [vmem:[#allocation4 + $0x14] sm:$0xf]
        %v668 = vld [vmem:[#allocation4 + $0x18] sm:$0xf]
        %v669 = vld [vmem:[#allocation4 + $0x1c] sm:$0xf]
        %v670 = vld [vmem:[#allocation4 + $0x20] sm:$0xf]
        %v671 = vld [vmem:[#allocation4 + $0x24] sm:$0xf]
        %v672 = vld [vmem:[#allocation4 + $0x28] sm:$0xf]
        %v673 = vld [vmem:[#allocation4 + $0x2c] sm:$0xf]
        %v674 = vld [vmem:[#allocation4 + $0x30] sm:$0xf]
        %v675 = vld [vmem:[#allocation4 + $0x34] sm:$0xf]
        %v676 = vld [vmem:[#allocation4 + $0x38] sm:$0xf]
        %v677 = vld [vmem:[#allocation4 + $0x3c] sm:$0xf]
        %v678 = vld [vmem:[%s4] sm:$0x1]
        %v680 = vperm.slane %v678, 0
        %v698 = vunpack.c.l.b16 %v662
        %v699 = vunpack.c.l.b16 %v663
        %v700 = vunpack.c.l.b16 %v664
        %v701 = vunpack.c.l.b16 %v665
        %v702 = vunpack.c.l.b16 %v666
        %v703 = vunpack.c.l.b16 %v667
        %v704 = vunpack.c.l.b16 %v668
        %v705 = vunpack.c.l.b16 %v669
        %v706 = vunpack.c.l.b16 %v670
        %v707 = vunpack.c.l.b16 %v671
        %v708 = vunpack.c.l.b16 %v672
        %v709 = vunpack.c.l.b16 %v673
        %v710 = vunpack.c.l.b16 %v674
        %v711 = vunpack.c.l.b16 %v675
        %v712 = vunpack.c.l.b16 %v676
        %v713 = vunpack.c.l.b16 %v677
        %v714 = vpack.c.b16 %v699, %v698
        %v715 = vpack.c.b16 %v701, %v700
        %v716 = vpack.c.b16 %v703, %v702
        %v717 = vpack.c.b16 %v705, %v704
        %v718 = vpack.c.b16 %v707, %v706
        %v719 = vpack.c.b16 %v709, %v708
        %v720 = vpack.c.b16 %v711, %v710
        %v721 = vpack.c.b16 %v713, %v712
        %730 = vmatpush.bf16.msra.mxu0 %v721
        %731 = vmatpush.bf16.msra.mxu0 %v720
        %732 = vmatpush.bf16.msra.mxu0 %v719
        %733 = vmatpush.bf16.msra.mxu0 %v718
        %734 = vmatpush.bf16.msra.mxu0 %v717
        %735 = vmatpush.bf16.msra.mxu0 %v716
        %736 = vmatpush.bf16.msra.mxu0 %v715
        %737 = vmatpush.bf16.msra.mxu0 %v714
        %738 = vmatmul.bf16.gmra.mxu0 %v654
        %v739 = vpop.f32.mrf.mxu0
        %v740 = vadd.f32 %v680, %v739
        %v741 = vpop.f32.mrf.mxu0
        %v742 = vadd.f32 %v680, %v741
        %743 = vmatmul.bf16.gmra.mxu0 %v655
        %v744 = vpop.f32.mrf.mxu0
        %v745 = vadd.f32 %v680, %v744
        %v746 = vpop.f32.mrf.mxu0
        %v747 = vadd.f32 %v680, %v746
        %748 = vmatmul.bf16.gmra.mxu0 %v656
        %v749 = vpop.f32.mrf.mxu0
        %v750 = vadd.f32 %v680, %v749
        %v751 = vpop.f32.mrf.mxu0
        %v752 = vadd.f32 %v680, %v751
        %753 = vmatmul.bf16.gmra.mxu0 %v657
        %v754 = vpop.f32.mrf.mxu0
        %v755 = vadd.f32 %v680, %v754
        %v756 = vpop.f32.mrf.mxu0
        %v757 = vadd.f32 %v680, %v756
        %758 = vmatmul.bf16.gmra.mxu0 %v658
        %v759 = vpop.f32.mrf.mxu0
        %v760 = vadd.f32 %v680, %v759
        %v761 = vpop.f32.mrf.mxu0
        %v762 = vadd.f32 %v680, %v761
        %763 = vmatmul.bf16.gmra.mxu0 %v659
        %v764 = vpop.f32.mrf.mxu0
        %v765 = vadd.f32 %v680, %v764
        %v766 = vpop.f32.mrf.mxu0
        %v767 = vadd.f32 %v680, %v766
        %768 = vmatmul.bf16.gmra.mxu0 %v660
        %v769 = vpop.f32.mrf.mxu0
        %v770 = vadd.f32 %v680, %v769
        %v771 = vpop.f32.mrf.mxu0
        %v772 = vadd.f32 %v680, %v771
        %773 = vmatmul.bf16.gmra.mxu0 %v661
        %v774 = vpop.f32.mrf.mxu0
        %v775 = vadd.f32 %v680, %v774
        %v776 = vpop.f32.mrf.mxu0
        %v777 = vadd.f32 %v680, %v776
        %778 = vdwg.mxu0
        %v779 = vmax.f32 %v740, 0.0
        %v780 = vmax.f32 %v742, 0.0
        %v781 = vmax.f32 %v745, 0.0
        %v782 = vmax.f32 %v747, 0.0
        %v783 = vmax.f32 %v750, 0.0
        %v784 = vmax.f32 %v752, 0.0
        %v785 = vmax.f32 %v755, 0.0
        %v786 = vmax.f32 %v757, 0.0
        %v787 = vmax.f32 %v760, 0.0
        %v788 = vmax.f32 %v762, 0.0
        %v789 = vmax.f32 %v765, 0.0
        %v790 = vmax.f32 %v767, 0.0
        %v791 = vmax.f32 %v770, 0.0
        %v792 = vmax.f32 %v772, 0.0
        %v793 = vmax.f32 %v775, 0.0
        %v794 = vmax.f32 %v777, 0.0
        %v795 = vpack.c.bf16 %v780, %v779
        %v796 = vpack.c.bf16 %v782, %v781
        %v797 = vpack.c.bf16 %v784, %v783
        %v798 = vpack.c.bf16 %v786, %v785
        %v799 = vpack.c.bf16 %v788, %v787
        %v800 = vpack.c.bf16 %v790, %v789
        %v801 = vpack.c.bf16 %v792, %v791
        %v802 = vpack.c.bf16 %v794, %v793
        %v803 = vld [vmem:[%s5] sm:$0xff]
        %v804 = vld [vmem:[%s5 + $0x8] sm:$0xff]
        %v805 = vld [vmem:[%s5 + $0x10] sm:$0xff]
        %v806 = vld [vmem:[%s5 + $0x18] sm:$0xff]
        %v807 = vld [vmem:[%s5 + $0x20] sm:$0xff]
        %v808 = vld [vmem:[%s5 + $0x28] sm:$0xff]
        %v809 = vld [vmem:[%s5 + $0x30] sm:$0xff]
        %v810 = vld [vmem:[%s5 + $0x38] sm:$0xff]
        %v811 = vld [vmem:[%s5 + $0x40] sm:$0xff]
        %v812 = vld [vmem:[%s5 + $0x48] sm:$0xff]
        %v813 = vld [vmem:[%s5 + $0x50] sm:$0xff]
        %v814 = vld [vmem:[%s5 + $0x58] sm:$0xff]
        %v815 = vld [vmem:[%s5 + $0x60] sm:$0xff]
        %v816 = vld [vmem:[%s5 + $0x68] sm:$0xff]
        %v817 = vld [vmem:[%s5 + $0x70] sm:$0xff]
        %v818 = vld [vmem:[%s5 + $0x78] sm:$0xff]
        %v819 = vld [vmem:[%s6] sm:$0x3]
        %v821 = vperm.slane %v819, 0
        %v822 = vperm.slane %v819, 1
        %v841 = vunpack.c.l.b16 %v803
        %v842 = vunpack.c.h.b16 %v803
        %v843 = vunpack.c.l.b16 %v804
        %v844 = vunpack.c.h.b16 %v804
        %v845 = vunpack.c.l.b16 %v805
        %v846 = vunpack.c.h.b16 %v805
        %v847 = vunpack.c.l.b16 %v806
        %v848 = vunpack.c.h.b16 %v806
        %v849 = vunpack.c.l.b16 %v807
        %v850 = vunpack.c.h.b16 %v807
        %v851 = vunpack.c.l.b16 %v808
        %v852 = vunpack.c.h.b16 %v808
        %v853 = vunpack.c.l.b16 %v809
        %v854 = vunpack.c.h.b16 %v809
        %v855 = vunpack.c.l.b16 %v810
        %v856 = vunpack.c.h.b16 %v810
        %v857 = vunpack.c.l.b16 %v811
        %v858 = vunpack.c.h.b16 %v811
        %v859 = vunpack.c.l.b16 %v812
        %v860 = vunpack.c.h.b16 %v812
        %v861 = vunpack.c.l.b16 %v813
        %v862 = vunpack.c.h.b16 %v813
        %v863 = vunpack.c.l.b16 %v814
        %v864 = vunpack.c.h.b16 %v814
        %v865 = vunpack.c.l.b16 %v815
        %v866 = vunpack.c.h.b16 %v815
        %v867 = vunpack.c.l.b16 %v816
        %v868 = vunpack.c.h.b16 %v816
        %v869 = vunpack.c.l.b16 %v817
        %v870 = vunpack.c.h.b16 %v817
        %v871 = vunpack.c.l.b16 %v818
        %v872 = vunpack.c.h.b16 %v818
        %v873 = vpack.c.b16 %v843, %v841
        %v874 = vpack.c.b16 %v844, %v842
        %v875 = vpack.c.b16 %v847, %v845
        %v876 = vpack.c.b16 %v848, %v846
        %v877 = vpack.c.b16 %v851, %v849
        %v878 = vpack.c.b16 %v852, %v850
        %v879 = vpack.c.b16 %v855, %v853
        %v880 = vpack.c.b16 %v856, %v854
        %v881 = vpack.c.b16 %v859, %v857
        %v882 = vpack.c.b16 %v860, %v858
        %v883 = vpack.c.b16 %v863, %v861
        %v884 = vpack.c.b16 %v864, %v862
        %v885 = vpack.c.b16 %v867, %v865
        %v886 = vpack.c.b16 %v868, %v866
        %v887 = vpack.c.b16 %v871, %v869
        %v888 = vpack.c.b16 %v872, %v870
        %905 = vmatpush.bf16.msra.mxu0 %v887
        %906 = vmatpush.bf16.msra.mxu0 %v885
        %907 = vmatpush.bf16.msra.mxu0 %v883
        %908 = vmatpush.bf16.msra.mxu0 %v881
        %909 = vmatpush.bf16.msra.mxu0 %v879
        %910 = vmatpush.bf16.msra.mxu0 %v877
        %911 = vmatpush.bf16.msra.mxu0 %v875
        %912 = vmatpush.bf16.msra.mxu0 %v873
        %913 = vmatmul.bf16.gmra.mxu0 %v795
        %v914 = vpop.f32.mrf.mxu0
        %v915 = vadd.f32 %v821, %v914
        %v916 = vpop.f32.mrf.mxu0
        %v917 = vadd.f32 %v821, %v916
        %918 = vmatmul.bf16.gmra.mxu0 %v796
        %v919 = vpop.f32.mrf.mxu0
        %v920 = vadd.f32 %v821, %v919
        %v921 = vpop.f32.mrf.mxu0
        %v922 = vadd.f32 %v821, %v921
        %923 = vmatmul.bf16.gmra.mxu0 %v797
        %v924 = vpop.f32.mrf.mxu0
        %v925 = vadd.f32 %v821, %v924
        %v926 = vpop.f32.mrf.mxu0
        %v927 = vadd.f32 %v821, %v926
        %928 = vmatmul.bf16.gmra.mxu0 %v798
        %v929 = vpop.f32.mrf.mxu0
        %v930 = vadd.f32 %v821, %v929
        %v931 = vpop.f32.mrf.mxu0
        %v932 = vadd.f32 %v821, %v931
        %933 = vmatmul.bf16.gmra.mxu0 %v799
        %v934 = vpop.f32.mrf.mxu0
        %v935 = vadd.f32 %v821, %v934
        %v936 = vpop.f32.mrf.mxu0
        %v937 = vadd.f32 %v821, %v936
        %938 = vmatmul.bf16.gmra.mxu0 %v800
        %v939 = vpop.f32.mrf.mxu0
        %v940 = vadd.f32 %v821, %v939
        %v941 = vpop.f32.mrf.mxu0
        %v942 = vadd.f32 %v821, %v941
        %943 = vmatmul.bf16.gmra.mxu0 %v801
        %v944 = vpop.f32.mrf.mxu0
        %v945 = vadd.f32 %v821, %v944
        %v946 = vpop.f32.mrf.mxu0
        %v947 = vadd.f32 %v821, %v946
        %948 = vmatmul.bf16.gmra.mxu0 %v802
        %v949 = vpop.f32.mrf.mxu0
        %v950 = vadd.f32 %v821, %v949
        %v951 = vpop.f32.mrf.mxu0
        %v952 = vadd.f32 %v821, %v951
        %953 = vdwg.mxu0
        %954 = vmatpush.bf16.msra.mxu0 %v888
        %955 = vmatpush.bf16.msra.mxu0 %v886
        %956 = vmatpush.bf16.msra.mxu0 %v884
        %957 = vmatpush.bf16.msra.mxu0 %v882
        %958 = vmatpush.bf16.msra.mxu0 %v880
        %959 = vmatpush.bf16.msra.mxu0 %v878
        %960 = vmatpush.bf16.msra.mxu0 %v876
        %961 = vmatpush.bf16.msra.mxu0 %v874
        %962 = vmatmul.bf16.gmra.mxu0 %v795
        %v963 = vpop.f32.mrf.mxu0
        %v964 = vadd.f32 %v822, %v963
        %v965 = vpop.f32.mrf.mxu0
        %v966 = vadd.f32 %v822, %v965
        %967 = vmatmul.bf16.gmra.mxu0 %v796
        %v968 = vpop.f32.mrf.mxu0
        %v969 = vadd.f32 %v822, %v968
        %v970 = vpop.f32.mrf.mxu0
        %v971 = vadd.f32 %v822, %v970
        %972 = vmatmul.bf16.gmra.mxu0 %v797
        %v973 = vpop.f32.mrf.mxu0
        %v974 = vadd.f32 %v822, %v973
        %v975 = vpop.f32.mrf.mxu0
        %v976 = vadd.f32 %v822, %v975
        %977 = vmatmul.bf16.gmra.mxu0 %v798
        %v978 = vpop.f32.mrf.mxu0
        %v979 = vadd.f32 %v822, %v978
        %v980 = vpop.f32.mrf.mxu0
        %v981 = vadd.f32 %v822, %v980
        %982 = vmatmul.bf16.gmra.mxu0 %v799
        %v983 = vpop.f32.mrf.mxu0
        %v984 = vadd.f32 %v822, %v983
        %v985 = vpop.f32.mrf.mxu0
        %v986 = vadd.f32 %v822, %v985
        %987 = vmatmul.bf16.gmra.mxu0 %v800
        %v988 = vpop.f32.mrf.mxu0
        %v989 = vadd.f32 %v822, %v988
        %v990 = vpop.f32.mrf.mxu0
        %v991 = vadd.f32 %v822, %v990
        %992 = vmatmul.bf16.gmra.mxu0 %v801
        %v993 = vpop.f32.mrf.mxu0
        %v994 = vadd.f32 %v822, %v993
        %v995 = vpop.f32.mrf.mxu0
        %v996 = vadd.f32 %v822, %v995
        %997 = vmatmul.bf16.gmra.mxu0 %v802
        %v998 = vpop.f32.mrf.mxu0
        %v999 = vadd.f32 %v822, %v998
        %v1000 = vpop.f32.mrf.mxu0
        %v1001 = vadd.f32 %v822, %v1000
        %1002 = vdwg.mxu0
        %v1003 = vmax.f32 %v915, 0.0
        %v1004 = vmax.f32 %v964, 0.0
        %v1005 = vmax.f32 %v917, 0.0
        %v1006 = vmax.f32 %v966, 0.0
        %v1007 = vmax.f32 %v920, 0.0
        %v1008 = vmax.f32 %v969, 0.0
        %v1009 = vmax.f32 %v922, 0.0
        %v1010 = vmax.f32 %v971, 0.0
        %v1011 = vmax.f32 %v925, 0.0
        %v1012 = vmax.f32 %v974, 0.0
        %v1013 = vmax.f32 %v927, 0.0
        %v1014 = vmax.f32 %v976, 0.0
        %v1015 = vmax.f32 %v930, 0.0
        %v1016 = vmax.f32 %v979, 0.0
        %v1017 = vmax.f32 %v932, 0.0
        %v1018 = vmax.f32 %v981, 0.0
        %v1019 = vmax.f32 %v935, 0.0
        %v1020 = vmax.f32 %v984, 0.0
        %v1021 = vmax.f32 %v937, 0.0
        %v1022 = vmax.f32 %v986, 0.0
        %v1023 = vmax.f32 %v940, 0.0
        %v1024 = vmax.f32 %v989, 0.0
        %v1025 = vmax.f32 %v942, 0.0
        %v1026 = vmax.f32 %v991, 0.0
        %v1027 = vmax.f32 %v945, 0.0
        %v1028 = vmax.f32 %v994, 0.0
        %v1029 = vmax.f32 %v947, 0.0
        %v1030 = vmax.f32 %v996, 0.0
        %v1031 = vmax.f32 %v950, 0.0
        %v1032 = vmax.f32 %v999, 0.0
        %v1033 = vmax.f32 %v952, 0.0
        %v1034 = vmax.f32 %v1001, 0.0
        %v1035 = vpack.c.bf16 %v1005, %v1003
        %v1036 = vpack.c.bf16 %v1006, %v1004
        %v1037 = vpack.c.bf16 %v1009, %v1007
        %v1038 = vpack.c.bf16 %v1010, %v1008
        %v1039 = vpack.c.bf16 %v1013, %v1011
        %v1040 = vpack.c.bf16 %v1014, %v1012
        %v1041 = vpack.c.bf16 %v1017, %v1015
        %v1042 = vpack.c.bf16 %v1018, %v1016
        %v1043 = vpack.c.bf16 %v1021, %v1019
        %v1044 = vpack.c.bf16 %v1022, %v1020
        %v1045 = vpack.c.bf16 %v1025, %v1023
        %v1046 = vpack.c.bf16 %v1026, %v1024
        %v1047 = vpack.c.bf16 %v1029, %v1027
        %v1048 = vpack.c.bf16 %v1030, %v1028
        %v1049 = vpack.c.bf16 %v1033, %v1031
        %v1050 = vpack.c.bf16 %v1034, %v1032
        %v1051 = vld [vmem:[#allocation6] sm:$0xff]
        %v1052 = vld [vmem:[#allocation6 + $0x8] sm:$0xff]
        %v1053 = vld [vmem:[#allocation6 + $0x10] sm:$0xff]
        %v1054 = vld [vmem:[#allocation6 + $0x18] sm:$0xff]
        %v1055 = vld [vmem:[#allocation6 + $0x20] sm:$0xff]
        %v1056 = vld [vmem:[#allocation6 + $0x28] sm:$0xff]
        %v1057 = vld [vmem:[#allocation6 + $0x30] sm:$0xff]
        %v1058 = vld [vmem:[#allocation6 + $0x38] sm:$0xff]
        %v1059 = vld [vmem:[#allocation6 + $0x40] sm:$0xff]
        %v1060 = vld [vmem:[#allocation6 + $0x48] sm:$0xff]
        %v1061 = vld [vmem:[#allocation6 + $0x50] sm:$0xff]
        %v1062 = vld [vmem:[#allocation6 + $0x58] sm:$0xff]
        %v1063 = vld [vmem:[#allocation6 + $0x60] sm:$0xff]
        %v1064 = vld [vmem:[#allocation6 + $0x68] sm:$0xff]
        %v1065 = vld [vmem:[#allocation6 + $0x70] sm:$0xff]
        %v1066 = vld [vmem:[#allocation6 + $0x78] sm:$0xff]
        %v1067 = vld [vmem:[#allocation6 + $0x80] sm:$0xff]
        %v1068 = vld [vmem:[#allocation6 + $0x88] sm:$0xff]
        %v1069 = vld [vmem:[#allocation6 + $0x90] sm:$0xff]
        %v1070 = vld [vmem:[#allocation6 + $0x98] sm:$0xff]
        %v1071 = vld [vmem:[#allocation6 + $0xa0] sm:$0xff]
        %v1072 = vld [vmem:[#allocation6 + $0xa8] sm:$0xff]
        %v1073 = vld [vmem:[#allocation6 + $0xb0] sm:$0xff]
        %v1074 = vld [vmem:[#allocation6 + $0xb8] sm:$0xff]
        %v1075 = vld [vmem:[#allocation6 + $0xc0] sm:$0xff]
        %v1076 = vld [vmem:[#allocation6 + $0xc8] sm:$0xff]
        %v1077 = vld [vmem:[#allocation6 + $0xd0] sm:$0xff]
        %v1078 = vld [vmem:[#allocation6 + $0xd8] sm:$0xff]
        %v1079 = vld [vmem:[#allocation6 + $0xe0] sm:$0xff]
        %v1080 = vld [vmem:[#allocation6 + $0xe8] sm:$0xff]
        %v1081 = vld [vmem:[#allocation6 + $0xf0] sm:$0xff]
        %v1082 = vld [vmem:[#allocation6 + $0xf8] sm:$0xff]
        %v1083 = vld [vmem:[#allocation6 + $0x100] sm:$0xff]
        %v1084 = vld [vmem:[#allocation6 + $0x108] sm:$0xff]
        %v1085 = vld [vmem:[#allocation6 + $0x110] sm:$0xff]
        %v1086 = vld [vmem:[#allocation6 + $0x118] sm:$0xff]
        %v1087 = vld [vmem:[#allocation6 + $0x120] sm:$0xff]
        %v1088 = vld [vmem:[#allocation6 + $0x128] sm:$0xff]
        %v1089 = vld [vmem:[#allocation6 + $0x130] sm:$0xff]
        %v1090 = vld [vmem:[#allocation6 + $0x138] sm:$0xff]
        %v1091 = vld [vmem:[#allocation6 + $0x140] sm:$0xff]
        %v1092 = vld [vmem:[#allocation6 + $0x148] sm:$0xff]
        %v1093 = vld [vmem:[#allocation6 + $0x150] sm:$0xff]
        %v1094 = vld [vmem:[#allocation6 + $0x158] sm:$0xff]
        %v1095 = vld [vmem:[#allocation6 + $0x160] sm:$0xff]
        %v1096 = vld [vmem:[#allocation6 + $0x168] sm:$0xff]
        %v1097 = vld [vmem:[#allocation6 + $0x170] sm:$0xff]
        %v1098 = vld [vmem:[#allocation6 + $0x178] sm:$0xff]
        %v1099 = vld [vmem:[#allocation6 + $0x180] sm:$0xff]
        %v1100 = vld [vmem:[#allocation6 + $0x188] sm:$0xff]
        %v1101 = vld [vmem:[#allocation6 + $0x190] sm:$0xff]
        %v1102 = vld [vmem:[#allocation6 + $0x198] sm:$0xff]
        %v1103 = vld [vmem:[#allocation6 + $0x1a0] sm:$0xff]
        %v1104 = vld [vmem:[#allocation6 + $0x1a8] sm:$0xff]
        %v1105 = vld [vmem:[#allocation6 + $0x1b0] sm:$0xff]
        %v1106 = vld [vmem:[#allocation6 + $0x1b8] sm:$0xff]
        %v1107 = vld [vmem:[#allocation6 + $0x1c0] sm:$0xff]
        %v1108 = vld [vmem:[#allocation6 + $0x1c8] sm:$0xff]
        %v1109 = vld [vmem:[#allocation6 + $0x1d0] sm:$0xff]
        %v1110 = vld [vmem:[#allocation6 + $0x1d8] sm:$0xff]
        %v1111 = vld [vmem:[#allocation6 + $0x1e0] sm:$0xff]
        %v1112 = vld [vmem:[#allocation6 + $0x1e8] sm:$0xff]
        %v1113 = vld [vmem:[#allocation6 + $0x1f0] sm:$0xff]
        %v1114 = vld [vmem:[#allocation6 + $0x1f8] sm:$0xff]
        %v1115 = vld [vmem:[%s8] sm:$0xf]
        %v1117 = vperm.slane %v1115, 0
        %v1118 = vperm.slane %v1115, 1
        %v1119 = vperm.slane %v1115, 2
        %v1120 = vperm.slane %v1115, 3
        %v1189 = vunpack.c.l.b16 %v1051
        %v1190 = vunpack.c.h.b16 %v1051
        %v1191 = vunpack.c.l.b16 %v1052
        %v1192 = vunpack.c.h.b16 %v1052
        %v1193 = vunpack.c.l.b16 %v1053
        %v1194 = vunpack.c.h.b16 %v1053
        %v1195 = vunpack.c.l.b16 %v1054
        %v1196 = vunpack.c.h.b16 %v1054
        %v1197 = vunpack.c.l.b16 %v1055
        %v1198 = vunpack.c.h.b16 %v1055
        %v1199 = vunpack.c.l.b16 %v1056
        %v1200 = vunpack.c.h.b16 %v1056
        %v1201 = vunpack.c.l.b16 %v1057
        %v1202 = vunpack.c.h.b16 %v1057
        %v1203 = vunpack.c.l.b16 %v1058
        %v1204 = vunpack.c.h.b16 %v1058
        %v1205 = vunpack.c.l.b16 %v1059
        %v1206 = vunpack.c.h.b16 %v1059
        %v1207 = vunpack.c.l.b16 %v1060
        %v1208 = vunpack.c.h.b16 %v1060
        %v1209 = vunpack.c.l.b16 %v1061
        %v1210 = vunpack.c.h.b16 %v1061
        %v1211 = vunpack.c.l.b16 %v1062
        %v1212 = vunpack.c.h.b16 %v1062
        %v1213 = vunpack.c.l.b16 %v1063
        %v1214 = vunpack.c.h.b16 %v1063
        %v1215 = vunpack.c.l.b16 %v1064
        %v1216 = vunpack.c.h.b16 %v1064
        %v1217 = vunpack.c.l.b16 %v1065
        %v1218 = vunpack.c.h.b16 %v1065
        %v1219 = vunpack.c.l.b16 %v1066
        %v1220 = vunpack.c.h.b16 %v1066
        %v1221 = vunpack.c.l.b16 %v1067
        %v1222 = vunpack.c.h.b16 %v1067
        %v1223 = vunpack.c.l.b16 %v1068
        %v1224 = vunpack.c.h.b16 %v1068
        %v1225 = vunpack.c.l.b16 %v1069
        %v1226 = vunpack.c.h.b16 %v1069
        %v1227 = vunpack.c.l.b16 %v1070
        %v1228 = vunpack.c.h.b16 %v1070
        %v1229 = vunpack.c.l.b16 %v1071
        %v1230 = vunpack.c.h.b16 %v1071
        %v1231 = vunpack.c.l.b16 %v1072
        %v1232 = vunpack.c.h.b16 %v1072
        %v1233 = vunpack.c.l.b16 %v1073
        %v1234 = vunpack.c.h.b16 %v1073
        %v1235 = vunpack.c.l.b16 %v1074
        %v1236 = vunpack.c.h.b16 %v1074
        %v1237 = vunpack.c.l.b16 %v1075
        %v1238 = vunpack.c.h.b16 %v1075
        %v1239 = vunpack.c.l.b16 %v1076
        %v1240 = vunpack.c.h.b16 %v1076
        %v1241 = vunpack.c.l.b16 %v1077
        %v1242 = vunpack.c.h.b16 %v1077
        %v1243 = vunpack.c.l.b16 %v1078
        %v1244 = vunpack.c.h.b16 %v1078
        %v1245 = vunpack.c.l.b16 %v1079
        %v1246 = vunpack.c.h.b16 %v1079
        %v1247 = vunpack.c.l.b16 %v1080
        %v1248 = vunpack.c.h.b16 %v1080
        %v1249 = vunpack.c.l.b16 %v1081
        %v1250 = vunpack.c.h.b16 %v1081
        %v1251 = vunpack.c.l.b16 %v1082
        %v1252 = vunpack.c.h.b16 %v1082
        %v1253 = vunpack.c.l.b16 %v1083
        %v1254 = vunpack.c.h.b16 %v1083
        %v1255 = vunpack.c.l.b16 %v1084
        %v1256 = vunpack.c.h.b16 %v1084
        %v1257 = vunpack.c.l.b16 %v1085
        %v1258 = vunpack.c.h.b16 %v1085
        %v1259 = vunpack.c.l.b16 %v1086
        %v1260 = vunpack.c.h.b16 %v1086
        %v1261 = vunpack.c.l.b16 %v1087
        %v1262 = vunpack.c.h.b16 %v1087
        %v1263 = vunpack.c.l.b16 %v1088
        %v1264 = vunpack.c.h.b16 %v1088
        %v1265 = vunpack.c.l.b16 %v1089
        %v1266 = vunpack.c.h.b16 %v1089
        %v1267 = vunpack.c.l.b16 %v1090
        %v1268 = vunpack.c.h.b16 %v1090
        %v1269 = vunpack.c.l.b16 %v1091
        %v1270 = vunpack.c.h.b16 %v1091
        %v1271 = vunpack.c.l.b16 %v1092
        %v1272 = vunpack.c.h.b16 %v1092
        %v1273 = vunpack.c.l.b16 %v1093
        %v1274 = vunpack.c.h.b16 %v1093
        %v1275 = vunpack.c.l.b16 %v1094
        %v1276 = vunpack.c.h.b16 %v1094
        %v1277 = vunpack.c.l.b16 %v1095
        %v1278 = vunpack.c.h.b16 %v1095
        %v1279 = vunpack.c.l.b16 %v1096
        %v1280 = vunpack.c.h.b16 %v1096
        %v1281 = vunpack.c.l.b16 %v1097
        %v1282 = vunpack.c.h.b16 %v1097
        %v1283 = vunpack.c.l.b16 %v1098
        %v1284 = vunpack.c.h.b16 %v1098
        %v1285 = vunpack.c.l.b16 %v1099
        %v1286 = vunpack.c.h.b16 %v1099
        %v1287 = vunpack.c.l.b16 %v1100
        %v1288 = vunpack.c.h.b16 %v1100
        %v1289 = vunpack.c.l.b16 %v1101
        %v1290 = vunpack.c.h.b16 %v1101
        %v1291 = vunpack.c.l.b16 %v1102
        %v1292 = vunpack.c.h.b16 %v1102
        %v1293 = vunpack.c.l.b16 %v1103
        %v1294 = vunpack.c.h.b16 %v1103
        %v1295 = vunpack.c.l.b16 %v1104
        %v1296 = vunpack.c.h.b16 %v1104
        %v1297 = vunpack.c.l.b16 %v1105
        %v1298 = vunpack.c.h.b16 %v1105
        %v1299 = vunpack.c.l.b16 %v1106
        %v1300 = vunpack.c.h.b16 %v1106
        %v1301 = vunpack.c.l.b16 %v1107
        %v1302 = vunpack.c.h.b16 %v1107
        %v1303 = vunpack.c.l.b16 %v1108
        %v1304 = vunpack.c.h.b16 %v1108
        %v1305 = vunpack.c.l.b16 %v1109
        %v1306 = vunpack.c.h.b16 %v1109
        %v1307 = vunpack.c.l.b16 %v1110
        %v1308 = vunpack.c.h.b16 %v1110
        %v1309 = vunpack.c.l.b16 %v1111
        %v1310 = vunpack.c.h.b16 %v1111
        %v1311 = vunpack.c.l.b16 %v1112
        %v1312 = vunpack.c.h.b16 %v1112
        %v1313 = vunpack.c.l.b16 %v1113
        %v1314 = vunpack.c.h.b16 %v1113
        %v1315 = vunpack.c.l.b16 %v1114
        %v1316 = vunpack.c.h.b16 %v1114
        %v1317 = vpack.c.b16 %v1193, %v1189
        %v1318 = vpack.c.b16 %v1194, %v1190
        %v1319 = vpack.c.b16 %v1195, %v1191
        %v1320 = vpack.c.b16 %v1196, %v1192
        %v1321 = vpack.c.b16 %v1201, %v1197
        %v1322 = vpack.c.b16 %v1202, %v1198
        %v1323 = vpack.c.b16 %v1203, %v1199
        %v1324 = vpack.c.b16 %v1204, %v1200
        %v1325 = vpack.c.b16 %v1209, %v1205
        %v1326 = vpack.c.b16 %v1210, %v1206
        %v1327 = vpack.c.b16 %v1211, %v1207
        %v1328 = vpack.c.b16 %v1212, %v1208
        %v1329 = vpack.c.b16 %v1217, %v1213
        %v1330 = vpack.c.b16 %v1218, %v1214
        %v1331 = vpack.c.b16 %v1219, %v1215
        %v1332 = vpack.c.b16 %v1220, %v1216
        %v1333 = vpack.c.b16 %v1225, %v1221
        %v1334 = vpack.c.b16 %v1226, %v1222
        %v1335 = vpack.c.b16 %v1227, %v1223
        %v1336 = vpack.c.b16 %v1228, %v1224
        %v1337 = vpack.c.b16 %v1233, %v1229
        %v1338 = vpack.c.b16 %v1234, %v1230
        %v1339 = vpack.c.b16 %v1235, %v1231
        %v1340 = vpack.c.b16 %v1236, %v1232
        %v1341 = vpack.c.b16 %v1241, %v1237
        %v1342 = vpack.c.b16 %v1242, %v1238
        %v1343 = vpack.c.b16 %v1243, %v1239
        %v1344 = vpack.c.b16 %v1244, %v1240
        %v1345 = vpack.c.b16 %v1249, %v1245
        %v1346 = vpack.c.b16 %v1250, %v1246
        %v1347 = vpack.c.b16 %v1251, %v1247
        %v1348 = vpack.c.b16 %v1252, %v1248
        %v1349 = vpack.c.b16 %v1257, %v1253
        %v1350 = vpack.c.b16 %v1258, %v1254
        %v1351 = vpack.c.b16 %v1259, %v1255
        %v1352 = vpack.c.b16 %v1260, %v1256
        %v1353 = vpack.c.b16 %v1265, %v1261
        %v1354 = vpack.c.b16 %v1266, %v1262
        %v1355 = vpack.c.b16 %v1267, %v1263
        %v1356 = vpack.c.b16 %v1268, %v1264
        %v1357 = vpack.c.b16 %v1273, %v1269
        %v1358 = vpack.c.b16 %v1274, %v1270
        %v1359 = vpack.c.b16 %v1275, %v1271
        %v1360 = vpack.c.b16 %v1276, %v1272
        %v1361 = vpack.c.b16 %v1281, %v1277
        %v1362 = vpack.c.b16 %v1282, %v1278
        %v1363 = vpack.c.b16 %v1283, %v1279
        %v1364 = vpack.c.b16 %v1284, %v1280
        %v1365 = vpack.c.b16 %v1289, %v1285
        %v1366 = vpack.c.b16 %v1290, %v1286
        %v1367 = vpack.c.b16 %v1291, %v1287
        %v1368 = vpack.c.b16 %v1292, %v1288
        %v1369 = vpack.c.b16 %v1297, %v1293
        %v1370 = vpack.c.b16 %v1298, %v1294
        %v1371 = vpack.c.b16 %v1299, %v1295
        %v1372 = vpack.c.b16 %v1300, %v1296
        %v1373 = vpack.c.b16 %v1305, %v1301
        %v1374 = vpack.c.b16 %v1306, %v1302
        %v1375 = vpack.c.b16 %v1307, %v1303
        %v1376 = vpack.c.b16 %v1308, %v1304
        %v1377 = vpack.c.b16 %v1313, %v1309
        %v1378 = vpack.c.b16 %v1314, %v1310
        %v1379 = vpack.c.b16 %v1315, %v1311
        %v1380 = vpack.c.b16 %v1316, %v1312
        %1445 = vmatpush.bf16.msra.mxu0 %v1345
        %1446 = vmatpush.bf16.msra.mxu0 %v1341
        %1447 = vmatpush.bf16.msra.mxu0 %v1337
        %1448 = vmatpush.bf16.msra.mxu0 %v1333
        %1449 = vmatpush.bf16.msra.mxu0 %v1329
        %1450 = vmatpush.bf16.msra.mxu0 %v1325
        %1451 = vmatpush.bf16.msra.mxu0 %v1321
        %1452 = vmatpush.bf16.msra.mxu0 %v1317
        %1453 = vmatmul.bf16.gmra.mxu0 %v1035
        %v1454 = vpop.f32.mrf.mxu0
        %v1455 = vadd.f32 %v1117, %v1454
        %v1456 = vpop.f32.mrf.mxu0
        %v1457 = vadd.f32 %v1117, %v1456
        %1458 = vmatmul.bf16.gmra.mxu0 %v1037
        %v1459 = vpop.f32.mrf.mxu0
        %v1460 = vadd.f32 %v1117, %v1459
        %v1461 = vpop.f32.mrf.mxu0
        %v1462 = vadd.f32 %v1117, %v1461
        %1463 = vmatmul.bf16.gmra.mxu0 %v1039
        %v1464 = vpop.f32.mrf.mxu0
        %v1465 = vadd.f32 %v1117, %v1464
        %v1466 = vpop.f32.mrf.mxu0
        %v1467 = vadd.f32 %v1117, %v1466
        %1468 = vmatmul.bf16.gmra.mxu0 %v1041
        %v1469 = vpop.f32.mrf.mxu0
        %v1470 = vadd.f32 %v1117, %v1469
        %v1471 = vpop.f32.mrf.mxu0
        %v1472 = vadd.f32 %v1117, %v1471
        %1473 = vmatmul.bf16.gmra.mxu0 %v1043
        %v1474 = vpop.f32.mrf.mxu0
        %v1475 = vadd.f32 %v1117, %v1474
        %v1476 = vpop.f32.mrf.mxu0
        %v1477 = vadd.f32 %v1117, %v1476
        %1478 = vmatmul.bf16.gmra.mxu0 %v1045
        %v1479 = vpop.f32.mrf.mxu0
        %v1480 = vadd.f32 %v1117, %v1479
        %v1481 = vpop.f32.mrf.mxu0
        %v1482 = vadd.f32 %v1117, %v1481
        %1483 = vmatmul.bf16.gmra.mxu0 %v1047
        %v1484 = vpop.f32.mrf.mxu0
        %v1485 = vadd.f32 %v1117, %v1484
        %v1486 = vpop.f32.mrf.mxu0
        %v1487 = vadd.f32 %v1117, %v1486
        %1488 = vmatmul.bf16.gmra.mxu0 %v1049
        %v1489 = vpop.f32.mrf.mxu0
        %v1490 = vadd.f32 %v1117, %v1489
        %v1491 = vpop.f32.mrf.mxu0
        %v1492 = vadd.f32 %v1117, %v1491
        %1493 = vdwg.mxu0
        %1494 = vmatpush.bf16.msra.mxu0 %v1377
        %1495 = vmatpush.bf16.msra.mxu0 %v1373
        %1496 = vmatpush.bf16.msra.mxu0 %v1369
        %1497 = vmatpush.bf16.msra.mxu0 %v1365
        %1498 = vmatpush.bf16.msra.mxu0 %v1361
        %1499 = vmatpush.bf16.msra.mxu0 %v1357
        %1500 = vmatpush.bf16.msra.mxu0 %v1353
        %1501 = vmatpush.bf16.msra.mxu0 %v1349
        %1502 = vmatmul.bf16.gmra.mxu0 %v1036
        %v1503 = vpop.f32.mrf.mxu0
        %v1504 = vadd.f32 %v1455, %v1503
        %v1505 = vpop.f32.mrf.mxu0
        %v1506 = vadd.f32 %v1457, %v1505
        %1507 = vmatmul.bf16.gmra.mxu0 %v1038
        %v1508 = vpop.f32.mrf.mxu0
        %v1509 = vadd.f32 %v1460, %v1508
        %v1510 = vpop.f32.mrf.mxu0
        %v1511 = vadd.f32 %v1462, %v1510
        %1512 = vmatmul.bf16.gmra.mxu0 %v1040
        %v1513 = vpop.f32.mrf.mxu0
        %v1514 = vadd.f32 %v1465, %v1513
        %v1515 = vpop.f32.mrf.mxu0
        %v1516 = vadd.f32 %v1467, %v1515
        %1517 = vmatmul.bf16.gmra.mxu0 %v1042
        %v1518 = vpop.f32.mrf.mxu0
        %v1519 = vadd.f32 %v1470, %v1518
        %v1520 = vpop.f32.mrf.mxu0
        %v1521 = vadd.f32 %v1472, %v1520
        %1522 = vmatmul.bf16.gmra.mxu0 %v1044
        %v1523 = vpop.f32.mrf.mxu0
        %v1524 = vadd.f32 %v1475, %v1523
        %v1525 = vpop.f32.mrf.mxu0
        %v1526 = vadd.f32 %v1477, %v1525
        %1527 = vmatmul.bf16.gmra.mxu0 %v1046
        %v1528 = vpop.f32.mrf.mxu0
        %v1529 = vadd.f32 %v1480, %v1528
        %v1530 = vpop.f32.mrf.mxu0
        %v1531 = vadd.f32 %v1482, %v1530
        %1532 = vmatmul.bf16.gmra.mxu0 %v1048
        %v1533 = vpop.f32.mrf.mxu0
        %v1534 = vadd.f32 %v1485, %v1533
        %v1535 = vpop.f32.mrf.mxu0
        %v1536 = vadd.f32 %v1487, %v1535
        %1537 = vmatmul.bf16.gmra.mxu0 %v1050
        %v1538 = vpop.f32.mrf.mxu0
        %v1539 = vadd.f32 %v1490, %v1538
        %v1540 = vpop.f32.mrf.mxu0
        %v1541 = vadd.f32 %v1492, %v1540
        %1542 = vdwg.mxu0
        %1543 = vmatpush.bf16.msra.mxu0 %v1346
        %1544 = vmatpush.bf16.msra.mxu0 %v1342
        %1545 = vmatpush.bf16.msra.mxu0 %v1338
        %1546 = vmatpush.bf16.msra.mxu0 %v1334
        %1547 = vmatpush.bf16.msra.mxu0 %v1330
        %1548 = vmatpush.bf16.msra.mxu0 %v1326
        %1549 = vmatpush.bf16.msra.mxu0 %v1322
        %1550 = vmatpush.bf16.msra.mxu0 %v1318
        %1551 = vmatmul.bf16.gmra.mxu0 %v1035
        %v1552 = vpop.f32.mrf.mxu0
        %v1553 = vadd.f32 %v1118, %v1552
        %v1554 = vpop.f32.mrf.mxu0
        %v1555 = vadd.f32 %v1118, %v1554
        %1556 = vmatmul.bf16.gmra.mxu0 %v1037
        %v1557 = vpop.f32.mrf.mxu0
        %v1558 = vadd.f32 %v1118, %v1557
        %v1559 = vpop.f32.mrf.mxu0
        %v1560 = vadd.f32 %v1118, %v1559
        %1561 = vmatmul.bf16.gmra.mxu0 %v1039
        %v1562 = vpop.f32.mrf.mxu0
        %v1563 = vadd.f32 %v1118, %v1562
        %v1564 = vpop.f32.mrf.mxu0
        %v1565 = vadd.f32 %v1118, %v1564
        %1566 = vmatmul.bf16.gmra.mxu0 %v1041
        %v1567 = vpop.f32.mrf.mxu0
        %v1568 = vadd.f32 %v1118, %v1567
        %v1569 = vpop.f32.mrf.mxu0
        %v1570 = vadd.f32 %v1118, %v1569
        %1571 = vmatmul.bf16.gmra.mxu0 %v1043
        %v1572 = vpop.f32.mrf.mxu0
        %v1573 = vadd.f32 %v1118, %v1572
        %v1574 = vpop.f32.mrf.mxu0
        %v1575 = vadd.f32 %v1118, %v1574
        %1576 = vmatmul.bf16.gmra.mxu0 %v1045
        %v1577 = vpop.f32.mrf.mxu0
        %v1578 = vadd.f32 %v1118, %v1577
        %v1579 = vpop.f32.mrf.mxu0
        %v1580 = vadd.f32 %v1118, %v1579
        %1581 = vmatmul.bf16.gmra.mxu0 %v1047
        %v1582 = vpop.f32.mrf.mxu0
        %v1583 = vadd.f32 %v1118, %v1582
        %v1584 = vpop.f32.mrf.mxu0
        %v1585 = vadd.f32 %v1118, %v1584
        %1586 = vmatmul.bf16.gmra.mxu0 %v1049
        %v1587 = vpop.f32.mrf.mxu0
        %v1588 = vadd.f32 %v1118, %v1587
        %v1589 = vpop.f32.mrf.mxu0
        %v1590 = vadd.f32 %v1118, %v1589
        %1591 = vdwg.mxu0
        %1592 = vmatpush.bf16.msra.mxu0 %v1378
        %1593 = vmatpush.bf16.msra.mxu0 %v1374
        %1594 = vmatpush.bf16.msra.mxu0 %v1370
        %1595 = vmatpush.bf16.msra.mxu0 %v1366
        %1596 = vmatpush.bf16.msra.mxu0 %v1362
        %1597 = vmatpush.bf16.msra.mxu0 %v1358
        %1598 = vmatpush.bf16.msra.mxu0 %v1354
        %1599 = vmatpush.bf16.msra.mxu0 %v1350
        %1600 = vmatmul.bf16.gmra.mxu0 %v1036
        %v1601 = vpop.f32.mrf.mxu0
        %v1602 = vadd.f32 %v1553, %v1601
        %v1603 = vpop.f32.mrf.mxu0
        %v1604 = vadd.f32 %v1555, %v1603
        %1605 = vmatmul.bf16.gmra.mxu0 %v1038
        %v1606 = vpop.f32.mrf.mxu0
        %v1607 = vadd.f32 %v1558, %v1606
        %v1608 = vpop.f32.mrf.mxu0
        %v1609 = vadd.f32 %v1560, %v1608
        %1610 = vmatmul.bf16.gmra.mxu0 %v1040
        %v1611 = vpop.f32.mrf.mxu0
        %v1612 = vadd.f32 %v1563, %v1611
        %v1613 = vpop.f32.mrf.mxu0
        %v1614 = vadd.f32 %v1565, %v1613
        %1615 = vmatmul.bf16.gmra.mxu0 %v1042
        %v1616 = vpop.f32.mrf.mxu0
        %v1617 = vadd.f32 %v1568, %v1616
        %v1618 = vpop.f32.mrf.mxu0
        %v1619 = vadd.f32 %v1570, %v1618
        %1620 = vmatmul.bf16.gmra.mxu0 %v1044
        %v1621 = vpop.f32.mrf.mxu0
        %v1622 = vadd.f32 %v1573, %v1621
        %v1623 = vpop.f32.mrf.mxu0
        %v1624 = vadd.f32 %v1575, %v1623
        %1625 = vmatmul.bf16.gmra.mxu0 %v1046
        %v1626 = vpop.f32.mrf.mxu0
        %v1627 = vadd.f32 %v1578, %v1626
        %v1628 = vpop.f32.mrf.mxu0
        %v1629 = vadd.f32 %v1580, %v1628
        %1630 = vmatmul.bf16.gmra.mxu0 %v1048
        %v1631 = vpop.f32.mrf.mxu0
        %v1632 = vadd.f32 %v1583, %v1631
        %v1633 = vpop.f32.mrf.mxu0
        %v1634 = vadd.f32 %v1585, %v1633
        %1635 = vmatmul.bf16.gmra.mxu0 %v1050
        %v1636 = vpop.f32.mrf.mxu0
        %v1637 = vadd.f32 %v1588, %v1636
        %v1638 = vpop.f32.mrf.mxu0
        %v1639 = vadd.f32 %v1590, %v1638
        %1640 = vdwg.mxu0
        %1641 = vmatpush.bf16.msra.mxu0 %v1347
        %1642 = vmatpush.bf16.msra.mxu0 %v1343
        %1643 = vmatpush.bf16.msra.mxu0 %v1339
        %1644 = vmatpush.bf16.msra.mxu0 %v1335
        %1645 = vmatpush.bf16.msra.mxu0 %v1331
        %1646 = vmatpush.bf16.msra.mxu0 %v1327
        %1647 = vmatpush.bf16.msra.mxu0 %v1323
        %1648 = vmatpush.bf16.msra.mxu0 %v1319
        %1649 = vmatmul.bf16.gmra.mxu0 %v1035
        %v1650 = vpop.f32.mrf.mxu0
        %v1651 = vadd.f32 %v1119, %v1650
        %v1652 = vpop.f32.mrf.mxu0
        %v1653 = vadd.f32 %v1119, %v1652
        %1654 = vmatmul.bf16.gmra.mxu0 %v1037
        %v1655 = vpop.f32.mrf.mxu0
        %v1656 = vadd.f32 %v1119, %v1655
        %v1657 = vpop.f32.mrf.mxu0
        %v1658 = vadd.f32 %v1119, %v1657
        %1659 = vmatmul.bf16.gmra.mxu0 %v1039
        %v1660 = vpop.f32.mrf.mxu0
        %v1661 = vadd.f32 %v1119, %v1660
        %v1662 = vpop.f32.mrf.mxu0
        %v1663 = vadd.f32 %v1119, %v1662
        %1664 = vmatmul.bf16.gmra.mxu0 %v1041
        %v1665 = vpop.f32.mrf.mxu0
        %v1666 = vadd.f32 %v1119, %v1665
        %v1667 = vpop.f32.mrf.mxu0
        %v1668 = vadd.f32 %v1119, %v1667
        %1669 = vmatmul.bf16.gmra.mxu0 %v1043
        %v1670 = vpop.f32.mrf.mxu0
        %v1671 = vadd.f32 %v1119, %v1670
        %v1672 = vpop.f32.mrf.mxu0
        %v1673 = vadd.f32 %v1119, %v1672
        %1674 = vmatmul.bf16.gmra.mxu0 %v1045
        %v1675 = vpop.f32.mrf.mxu0
        %v1676 = vadd.f32 %v1119, %v1675
        %v1677 = vpop.f32.mrf.mxu0
        %v1678 = vadd.f32 %v1119, %v1677
        %1679 = vmatmul.bf16.gmra.mxu0 %v1047
        %v1680 = vpop.f32.mrf.mxu0
        %v1681 = vadd.f32 %v1119, %v1680
        %v1682 = vpop.f32.mrf.mxu0
        %v1683 = vadd.f32 %v1119, %v1682
        %1684 = vmatmul.bf16.gmra.mxu0 %v1049
        %v1685 = vpop.f32.mrf.mxu0
        %v1686 = vadd.f32 %v1119, %v1685
        %v1687 = vpop.f32.mrf.mxu0
        %v1688 = vadd.f32 %v1119, %v1687
        %1689 = vdwg.mxu0
        %1690 = vmatpush.bf16.msra.mxu0 %v1379
        %1691 = vmatpush.bf16.msra.mxu0 %v1375
        %1692 = vmatpush.bf16.msra.mxu0 %v1371
        %1693 = vmatpush.bf16.msra.mxu0 %v1367
        %1694 = vmatpush.bf16.msra.mxu0 %v1363
        %1695 = vmatpush.bf16.msra.mxu0 %v1359
        %1696 = vmatpush.bf16.msra.mxu0 %v1355
        %1697 = vmatpush.bf16.msra.mxu0 %v1351
        %1698 = vmatmul.bf16.gmra.mxu0 %v1036
        %v1699 = vpop.f32.mrf.mxu0
        %v1700 = vadd.f32 %v1651, %v1699
        %v1701 = vpop.f32.mrf.mxu0
        %v1702 = vadd.f32 %v1653, %v1701
        %1703 = vmatmul.bf16.gmra.mxu0 %v1038
        %v1704 = vpop.f32.mrf.mxu0
        %v1705 = vadd.f32 %v1656, %v1704
        %v1706 = vpop.f32.mrf.mxu0
        %v1707 = vadd.f32 %v1658, %v1706
        %1708 = vmatmul.bf16.gmra.mxu0 %v1040
        %v1709 = vpop.f32.mrf.mxu0
        %v1710 = vadd.f32 %v1661, %v1709
        %v1711 = vpop.f32.mrf.mxu0
        %v1712 = vadd.f32 %v1663, %v1711
        %1713 = vmatmul.bf16.gmra.mxu0 %v1042
        %v1714 = vpop.f32.mrf.mxu0
        %v1715 = vadd.f32 %v1666, %v1714
        %v1716 = vpop.f32.mrf.mxu0
        %v1717 = vadd.f32 %v1668, %v1716
        %1718 = vmatmul.bf16.gmra.mxu0 %v1044
        %v1719 = vpop.f32.mrf.mxu0
        %v1720 = vadd.f32 %v1671, %v1719
        %v1721 = vpop.f32.mrf.mxu0
        %v1722 = vadd.f32 %v1673, %v1721
        %1723 = vmatmul.bf16.gmra.mxu0 %v1046
        %v1724 = vpop.f32.mrf.mxu0
        %v1725 = vadd.f32 %v1676, %v1724
        %v1726 = vpop.f32.mrf.mxu0
        %v1727 = vadd.f32 %v1678, %v1726
        %1728 = vmatmul.bf16.gmra.mxu0 %v1048
        %v1729 = vpop.f32.mrf.mxu0
        %v1730 = vadd.f32 %v1681, %v1729
        %v1731 = vpop.f32.mrf.mxu0
        %v1732 = vadd.f32 %v1683, %v1731
        %1733 = vmatmul.bf16.gmra.mxu0 %v1050
        %v1734 = vpop.f32.mrf.mxu0
        %v1735 = vadd.f32 %v1686, %v1734
        %v1736 = vpop.f32.mrf.mxu0
        %v1737 = vadd.f32 %v1688, %v1736
        %1738 = vdwg.mxu0
        %1739 = vmatpush.bf16.msra.mxu0 %v1348
        %1740 = vmatpush.bf16.msra.mxu0 %v1344
        %1741 = vmatpush.bf16.msra.mxu0 %v1340
        %1742 = vmatpush.bf16.msra.mxu0 %v1336
        %1743 = vmatpush.bf16.msra.mxu0 %v1332
        %1744 = vmatpush.bf16.msra.mxu0 %v1328
        %1745 = vmatpush.bf16.msra.mxu0 %v1324
        %1746 = vmatpush.bf16.msra.mxu0 %v1320
        %1747 = vmatmul.bf16.gmra.mxu0 %v1035
        %v1748 = vpop.f32.mrf.mxu0
        %v1749 = vadd.f32 %v1120, %v1748
        %v1750 = vpop.f32.mrf.mxu0
        %v1751 = vadd.f32 %v1120, %v1750
        %1752 = vmatmul.bf16.gmra.mxu0 %v1037
        %v1753 = vpop.f32.mrf.mxu0
        %v1754 = vadd.f32 %v1120, %v1753
        %v1755 = vpop.f32.mrf.mxu0
        %v1756 = vadd.f32 %v1120, %v1755
        %1757 = vmatmul.bf16.gmra.mxu0 %v1039
        %v1758 = vpop.f32.mrf.mxu0
        %v1759 = vadd.f32 %v1120, %v1758
        %v1760 = vpop.f32.mrf.mxu0
        %v1761 = vadd.f32 %v1120, %v1760
        %1762 = vmatmul.bf16.gmra.mxu0 %v1041
        %v1763 = vpop.f32.mrf.mxu0
        %v1764 = vadd.f32 %v1120, %v1763
        %v1765 = vpop.f32.mrf.mxu0
        %v1766 = vadd.f32 %v1120, %v1765
        %1767 = vmatmul.bf16.gmra.mxu0 %v1043
        %v1768 = vpop.f32.mrf.mxu0
        %v1769 = vadd.f32 %v1120, %v1768
        %v1770 = vpop.f32.mrf.mxu0
        %v1771 = vadd.f32 %v1120, %v1770
        %1772 = vmatmul.bf16.gmra.mxu0 %v1045
        %v1773 = vpop.f32.mrf.mxu0
        %v1774 = vadd.f32 %v1120, %v1773
        %v1775 = vpop.f32.mrf.mxu0
        %v1776 = vadd.f32 %v1120, %v1775
        %1777 = vmatmul.bf16.gmra.mxu0 %v1047
        %v1778 = vpop.f32.mrf.mxu0
        %v1779 = vadd.f32 %v1120, %v1778
        %v1780 = vpop.f32.mrf.mxu0
        %v1781 = vadd.f32 %v1120, %v1780
        %1782 = vmatmul.bf16.gmra.mxu0 %v1049
        %v1783 = vpop.f32.mrf.mxu0
        %v1784 = vadd.f32 %v1120, %v1783
        %v1785 = vpop.f32.mrf.mxu0
        %v1786 = vadd.f32 %v1120, %v1785
        %1787 = vdwg.mxu0
        %1788 = vmatpush.bf16.msra.mxu0 %v1380
        %1789 = vmatpush.bf16.msra.mxu0 %v1376
        %1790 = vmatpush.bf16.msra.mxu0 %v1372
        %1791 = vmatpush.bf16.msra.mxu0 %v1368
        %1792 = vmatpush.bf16.msra.mxu0 %v1364
        %1793 = vmatpush.bf16.msra.mxu0 %v1360
        %1794 = vmatpush.bf16.msra.mxu0 %v1356
        %1795 = vmatpush.bf16.msra.mxu0 %v1352
        %1796 = vmatmul.bf16.gmra.mxu0 %v1036
        %v1797 = vpop.f32.mrf.mxu0
        %v1798 = vadd.f32 %v1749, %v1797
        %v1799 = vpop.f32.mrf.mxu0
        %v1800 = vadd.f32 %v1751, %v1799
        %1801 = vmatmul.bf16.gmra.mxu0 %v1038
        %v1802 = vpop.f32.mrf.mxu0
        %v1803 = vadd.f32 %v1754, %v1802
        %v1804 = vpop.f32.mrf.mxu0
        %v1805 = vadd.f32 %v1756, %v1804
        %1806 = vmatmul.bf16.gmra.mxu0 %v1040
        %v1807 = vpop.f32.mrf.mxu0
        %v1808 = vadd.f32 %v1759, %v1807
        %v1809 = vpop.f32.mrf.mxu0
        %v1810 = vadd.f32 %v1761, %v1809
        %1811 = vmatmul.bf16.gmra.mxu0 %v1042
        %v1812 = vpop.f32.mrf.mxu0
        %v1813 = vadd.f32 %v1764, %v1812
        %v1814 = vpop.f32.mrf.mxu0
        %v1815 = vadd.f32 %v1766, %v1814
        %1816 = vmatmul.bf16.gmra.mxu0 %v1044
        %v1817 = vpop.f32.mrf.mxu0
        %v1818 = vadd.f32 %v1769, %v1817
        %v1819 = vpop.f32.mrf.mxu0
        %v1820 = vadd.f32 %v1771, %v1819
        %1821 = vmatmul.bf16.gmra.mxu0 %v1046
        %v1822 = vpop.f32.mrf.mxu0
        %v1823 = vadd.f32 %v1774, %v1822
        %v1824 = vpop.f32.mrf.mxu0
        %v1825 = vadd.f32 %v1776, %v1824
        %1826 = vmatmul.bf16.gmra.mxu0 %v1048
        %v1827 = vpop.f32.mrf.mxu0
        %v1828 = vadd.f32 %v1779, %v1827
        %v1829 = vpop.f32.mrf.mxu0
        %v1830 = vadd.f32 %v1781, %v1829
        %1831 = vmatmul.bf16.gmra.mxu0 %v1050
        %v1832 = vpop.f32.mrf.mxu0
        %v1833 = vadd.f32 %v1784, %v1832
        %v1834 = vpop.f32.mrf.mxu0
        %v1835 = vadd.f32 %v1786, %v1834
        %1836 = vdwg.mxu0
        %v1837 = vmax.f32 %v1504, 0.0
        %v1838 = vmax.f32 %v1602, 0.0
        %v1839 = vmax.f32 %v1700, 0.0
        %v1840 = vmax.f32 %v1798, 0.0
        %v1841 = vmax.f32 %v1506, 0.0
        %v1842 = vmax.f32 %v1604, 0.0
        %v1843 = vmax.f32 %v1702, 0.0
        %v1844 = vmax.f32 %v1800, 0.0
        %v1845 = vmax.f32 %v1509, 0.0
        %v1846 = vmax.f32 %v1607, 0.0
        %v1847 = vmax.f32 %v1705, 0.0
        %v1848 = vmax.f32 %v1803, 0.0
        %v1849 = vmax.f32 %v1511, 0.0
        %v1850 = vmax.f32 %v1609, 0.0
        %v1851 = vmax.f32 %v1707, 0.0
        %v1852 = vmax.f32 %v1805, 0.0
        %v1853 = vmax.f32 %v1514, 0.0
        %v1854 = vmax.f32 %v1612, 0.0
        %v1855 = vmax.f32 %v1710, 0.0
        %v1856 = vmax.f32 %v1808, 0.0
        %v1857 = vmax.f32 %v1516, 0.0
        %v1858 = vmax.f32 %v1614, 0.0
        %v1859 = vmax.f32 %v1712, 0.0
        %v1860 = vmax.f32 %v1810, 0.0
        %v1861 = vmax.f32 %v1519, 0.0
        %v1862 = vmax.f32 %v1617, 0.0
        %v1863 = vmax.f32 %v1715, 0.0
        %v1864 = vmax.f32 %v1813, 0.0
        %v1865 = vmax.f32 %v1521, 0.0
        %v1866 = vmax.f32 %v1619, 0.0
        %v1867 = vmax.f32 %v1717, 0.0
        %v1868 = vmax.f32 %v1815, 0.0
        %v1869 = vmax.f32 %v1524, 0.0
        %v1870 = vmax.f32 %v1622, 0.0
        %v1871 = vmax.f32 %v1720, 0.0
        %v1872 = vmax.f32 %v1818, 0.0
        %v1873 = vmax.f32 %v1526, 0.0
        %v1874 = vmax.f32 %v1624, 0.0
        %v1875 = vmax.f32 %v1722, 0.0
        %v1876 = vmax.f32 %v1820, 0.0
        %v1877 = vmax.f32 %v1529, 0.0
        %v1878 = vmax.f32 %v1627, 0.0
        %v1879 = vmax.f32 %v1725, 0.0
        %v1880 = vmax.f32 %v1823, 0.0
        %v1881 = vmax.f32 %v1531, 0.0
        %v1882 = vmax.f32 %v1629, 0.0
        %v1883 = vmax.f32 %v1727, 0.0
        %v1884 = vmax.f32 %v1825, 0.0
        %v1885 = vmax.f32 %v1534, 0.0
        %v1886 = vmax.f32 %v1632, 0.0
        %v1887 = vmax.f32 %v1730, 0.0
        %v1888 = vmax.f32 %v1828, 0.0
        %v1889 = vmax.f32 %v1536, 0.0
        %v1890 = vmax.f32 %v1634, 0.0
        %v1891 = vmax.f32 %v1732, 0.0
        %v1892 = vmax.f32 %v1830, 0.0
        %v1893 = vmax.f32 %v1539, 0.0
        %v1894 = vmax.f32 %v1637, 0.0
        %v1895 = vmax.f32 %v1735, 0.0
        %v1896 = vmax.f32 %v1833, 0.0
        %v1897 = vmax.f32 %v1541, 0.0
        %v1898 = vmax.f32 %v1639, 0.0
        %v1899 = vmax.f32 %v1737, 0.0
        %v1900 = vmax.f32 %v1835, 0.0
        %v1901 = vpack.c.bf16 %v1841, %v1837
        %v1902 = vpack.c.bf16 %v1842, %v1838
        %v1903 = vpack.c.bf16 %v1843, %v1839
        %v1904 = vpack.c.bf16 %v1844, %v1840
        %v1905 = vpack.c.bf16 %v1849, %v1845
        %v1906 = vpack.c.bf16 %v1850, %v1846
        %v1907 = vpack.c.bf16 %v1851, %v1847
        %v1908 = vpack.c.bf16 %v1852, %v1848
        %v1909 = vpack.c.bf16 %v1857, %v1853
        %v1910 = vpack.c.bf16 %v1858, %v1854
        %v1911 = vpack.c.bf16 %v1859, %v1855
        %v1912 = vpack.c.bf16 %v1860, %v1856
        %v1913 = vpack.c.bf16 %v1865, %v1861
        %v1914 = vpack.c.bf16 %v1866, %v1862
        %v1915 = vpack.c.bf16 %v1867, %v1863
        %v1916 = vpack.c.bf16 %v1868, %v1864
        %v1917 = vpack.c.bf16 %v1873, %v1869
        %v1918 = vpack.c.bf16 %v1874, %v1870
        %v1919 = vpack.c.bf16 %v1875, %v1871
        %v1920 = vpack.c.bf16 %v1876, %v1872
        %v1921 = vpack.c.bf16 %v1881, %v1877
        %v1922 = vpack.c.bf16 %v1882, %v1878
        %v1923 = vpack.c.bf16 %v1883, %v1879
        %v1924 = vpack.c.bf16 %v1884, %v1880
        %v1925 = vpack.c.bf16 %v1889, %v1885
        %v1926 = vpack.c.bf16 %v1890, %v1886
        %v1927 = vpack.c.bf16 %v1891, %v1887
        %v1928 = vpack.c.bf16 %v1892, %v1888
        %v1929 = vpack.c.bf16 %v1897, %v1893
        %v1930 = vpack.c.bf16 %v1898, %v1894
        %v1931 = vpack.c.bf16 %v1899, %v1895
        %v1932 = vpack.c.bf16 %v1900, %v1896
        %v1933 = vld [vmem:[#allocation7] sm:$0xf]
        %v1934 = vld [vmem:[#allocation7 + $0x4] sm:$0xf]
        %v1935 = vld [vmem:[#allocation7 + $0x8] sm:$0xf]
        %v1936 = vld [vmem:[#allocation7 + $0xc] sm:$0xf]
        %v1937 = vld [vmem:[#allocation7 + $0x10] sm:$0xf]
        %v1938 = vld [vmem:[#allocation7 + $0x14] sm:$0xf]
        %v1939 = vld [vmem:[#allocation7 + $0x18] sm:$0xf]
        %v1940 = vld [vmem:[#allocation7 + $0x1c] sm:$0xf]
        %v1941 = vld [vmem:[#allocation7 + $0x20] sm:$0xf]
        %v1942 = vld [vmem:[#allocation7 + $0x24] sm:$0xf]
        %v1943 = vld [vmem:[#allocation7 + $0x28] sm:$0xf]
        %v1944 = vld [vmem:[#allocation7 + $0x2c] sm:$0xf]
        %v1945 = vld [vmem:[#allocation7 + $0x30] sm:$0xf]
        %v1946 = vld [vmem:[#allocation7 + $0x34] sm:$0xf]
        %v1947 = vld [vmem:[#allocation7 + $0x38] sm:$0xf]
        %v1948 = vld [vmem:[#allocation7 + $0x3c] sm:$0xf]
        %v1949 = vld [vmem:[#allocation7 + $0x40] sm:$0xf]
        %v1950 = vld [vmem:[#allocation7 + $0x44] sm:$0xf]
        %v1951 = vld [vmem:[#allocation7 + $0x48] sm:$0xf]
        %v1952 = vld [vmem:[#allocation7 + $0x4c] sm:$0xf]
        %v1953 = vld [vmem:[#allocation7 + $0x50] sm:$0xf]
        %v1954 = vld [vmem:[#allocation7 + $0x54] sm:$0xf]
        %v1955 = vld [vmem:[#allocation7 + $0x58] sm:$0xf]
        %v1956 = vld [vmem:[#allocation7 + $0x5c] sm:$0xf]
        %v1957 = vld [vmem:[#allocation7 + $0x60] sm:$0xf]
        %v1958 = vld [vmem:[#allocation7 + $0x64] sm:$0xf]
        %v1959 = vld [vmem:[#allocation7 + $0x68] sm:$0xf]
        %v1960 = vld [vmem:[#allocation7 + $0x6c] sm:$0xf]
        %v1961 = vld [vmem:[#allocation7 + $0x70] sm:$0xf]
        %v1962 = vld [vmem:[#allocation7 + $0x74] sm:$0xf]
        %v1963 = vld [vmem:[#allocation7 + $0x78] sm:$0xf]
        %v1964 = vld [vmem:[#allocation7 + $0x7c] sm:$0xf]
        %v1965 = vld [vmem:[#allocation7 + $0x80] sm:$0xf]
        %v1966 = vld [vmem:[#allocation7 + $0x84] sm:$0xf]
        %v1967 = vld [vmem:[#allocation7 + $0x88] sm:$0xf]
        %v1968 = vld [vmem:[#allocation7 + $0x8c] sm:$0xf]
        %v1969 = vld [vmem:[#allocation7 + $0x90] sm:$0xf]
        %v1970 = vld [vmem:[#allocation7 + $0x94] sm:$0xf]
        %v1971 = vld [vmem:[#allocation7 + $0x98] sm:$0xf]
        %v1972 = vld [vmem:[#allocation7 + $0x9c] sm:$0xf]
        %v1973 = vld [vmem:[#allocation7 + $0xa0] sm:$0xf]
        %v1974 = vld [vmem:[#allocation7 + $0xa4] sm:$0xf]
        %v1975 = vld [vmem:[#allocation7 + $0xa8] sm:$0xf]
        %v1976 = vld [vmem:[#allocation7 + $0xac] sm:$0xf]
        %v1977 = vld [vmem:[#allocation7 + $0xb0] sm:$0xf]
        %v1978 = vld [vmem:[#allocation7 + $0xb4] sm:$0xf]
        %v1979 = vld [vmem:[#allocation7 + $0xb8] sm:$0xf]
        %v1980 = vld [vmem:[#allocation7 + $0xbc] sm:$0xf]
        %v1981 = vld [vmem:[#allocation7 + $0xc0] sm:$0xf]
        %v1982 = vld [vmem:[#allocation7 + $0xc4] sm:$0xf]
        %v1983 = vld [vmem:[#allocation7 + $0xc8] sm:$0xf]
        %v1984 = vld [vmem:[#allocation7 + $0xcc] sm:$0xf]
        %v1985 = vld [vmem:[#allocation7 + $0xd0] sm:$0xf]
        %v1986 = vld [vmem:[#allocation7 + $0xd4] sm:$0xf]
        %v1987 = vld [vmem:[#allocation7 + $0xd8] sm:$0xf]
        %v1988 = vld [vmem:[#allocation7 + $0xdc] sm:$0xf]
        %v1989 = vld [vmem:[#allocation7 + $0xe0] sm:$0xf]
        %v1990 = vld [vmem:[#allocation7 + $0xe4] sm:$0xf]
        %v1991 = vld [vmem:[#allocation7 + $0xe8] sm:$0xf]
        %v1992 = vld [vmem:[#allocation7 + $0xec] sm:$0xf]
        %v1993 = vld [vmem:[#allocation7 + $0xf0] sm:$0xf]
        %v1994 = vld [vmem:[#allocation7 + $0xf4] sm:$0xf]
        %v1995 = vld [vmem:[#allocation7 + $0xf8] sm:$0xf]
        %v1996 = vld [vmem:[#allocation7 + $0xfc] sm:$0xf]
        %v1997 = vld [vmem:[%s10] sm:$0x1]
        %v1999 = vperm.slane %v1997, 0
        %v2065 = vunpack.c.l.b16 %v1933
        %v2066 = vunpack.c.l.b16 %v1934
        %v2067 = vunpack.c.l.b16 %v1935
        %v2068 = vunpack.c.l.b16 %v1936
        %v2069 = vunpack.c.l.b16 %v1937
        %v2070 = vunpack.c.l.b16 %v1938
        %v2071 = vunpack.c.l.b16 %v1939
        %v2072 = vunpack.c.l.b16 %v1940
        %v2073 = vunpack.c.l.b16 %v1941
        %v2074 = vunpack.c.l.b16 %v1942
        %v2075 = vunpack.c.l.b16 %v1943
        %v2076 = vunpack.c.l.b16 %v1944
        %v2077 = vunpack.c.l.b16 %v1945
        %v2078 = vunpack.c.l.b16 %v1946
        %v2079 = vunpack.c.l.b16 %v1947
        %v2080 = vunpack.c.l.b16 %v1948
        %v2081 = vunpack.c.l.b16 %v1949
        %v2082 = vunpack.c.l.b16 %v1950
        %v2083 = vunpack.c.l.b16 %v1951
        %v2084 = vunpack.c.l.b16 %v1952
        %v2085 = vunpack.c.l.b16 %v1953
        %v2086 = vunpack.c.l.b16 %v1954
        %v2087 = vunpack.c.l.b16 %v1955
        %v2088 = vunpack.c.l.b16 %v1956
        %v2089 = vunpack.c.l.b16 %v1957
        %v2090 = vunpack.c.l.b16 %v1958
        %v2091 = vunpack.c.l.b16 %v1959
        %v2092 = vunpack.c.l.b16 %v1960
        %v2093 = vunpack.c.l.b16 %v1961
        %v2094 = vunpack.c.l.b16 %v1962
        %v2095 = vunpack.c.l.b16 %v1963
        %v2096 = vunpack.c.l.b16 %v1964
        %v2097 = vunpack.c.l.b16 %v1965
        %v2098 = vunpack.c.l.b16 %v1966
        %v2099 = vunpack.c.l.b16 %v1967
        %v2100 = vunpack.c.l.b16 %v1968
        %v2101 = vunpack.c.l.b16 %v1969
        %v2102 = vunpack.c.l.b16 %v1970
        %v2103 = vunpack.c.l.b16 %v1971
        %v2104 = vunpack.c.l.b16 %v1972
        %v2105 = vunpack.c.l.b16 %v1973
        %v2106 = vunpack.c.l.b16 %v1974
        %v2107 = vunpack.c.l.b16 %v1975
        %v2108 = vunpack.c.l.b16 %v1976
        %v2109 = vunpack.c.l.b16 %v1977
        %v2110 = vunpack.c.l.b16 %v1978
        %v2111 = vunpack.c.l.b16 %v1979
        %v2112 = vunpack.c.l.b16 %v1980
        %v2113 = vunpack.c.l.b16 %v1981
        %v2114 = vunpack.c.l.b16 %v1982
        %v2115 = vunpack.c.l.b16 %v1983
        %v2116 = vunpack.c.l.b16 %v1984
        %v2117 = vunpack.c.l.b16 %v1985
        %v2118 = vunpack.c.l.b16 %v1986
        %v2119 = vunpack.c.l.b16 %v1987
        %v2120 = vunpack.c.l.b16 %v1988
        %v2121 = vunpack.c.l.b16 %v1989
        %v2122 = vunpack.c.l.b16 %v1990
        %v2123 = vunpack.c.l.b16 %v1991
        %v2124 = vunpack.c.l.b16 %v1992
        %v2125 = vunpack.c.l.b16 %v1993
        %v2126 = vunpack.c.l.b16 %v1994
        %v2127 = vunpack.c.l.b16 %v1995
        %v2128 = vunpack.c.l.b16 %v1996
        %v2129 = vpack.c.b16 %v2066, %v2065
        %v2130 = vpack.c.b16 %v2068, %v2067
        %v2131 = vpack.c.b16 %v2070, %v2069
        %v2132 = vpack.c.b16 %v2072, %v2071
        %v2133 = vpack.c.b16 %v2074, %v2073
        %v2134 = vpack.c.b16 %v2076, %v2075
        %v2135 = vpack.c.b16 %v2078, %v2077
        %v2136 = vpack.c.b16 %v2080, %v2079
        %v2137 = vpack.c.b16 %v2082, %v2081
        %v2138 = vpack.c.b16 %v2084, %v2083
        %v2139 = vpack.c.b16 %v2086, %v2085
        %v2140 = vpack.c.b16 %v2088, %v2087
        %v2141 = vpack.c.b16 %v2090, %v2089
        %v2142 = vpack.c.b16 %v2092, %v2091
        %v2143 = vpack.c.b16 %v2094, %v2093
        %v2144 = vpack.c.b16 %v2096, %v2095
        %v2145 = vpack.c.b16 %v2098, %v2097
        %v2146 = vpack.c.b16 %v2100, %v2099
        %v2147 = vpack.c.b16 %v2102, %v2101
        %v2148 = vpack.c.b16 %v2104, %v2103
        %v2149 = vpack.c.b16 %v2106, %v2105
        %v2150 = vpack.c.b16 %v2108, %v2107
        %v2151 = vpack.c.b16 %v2110, %v2109
        %v2152 = vpack.c.b16 %v2112, %v2111
        %v2153 = vpack.c.b16 %v2114, %v2113
        %v2154 = vpack.c.b16 %v2116, %v2115
        %v2155 = vpack.c.b16 %v2118, %v2117
        %v2156 = vpack.c.b16 %v2120, %v2119
        %v2157 = vpack.c.b16 %v2122, %v2121
        %v2158 = vpack.c.b16 %v2124, %v2123
        %v2159 = vpack.c.b16 %v2126, %v2125
        %v2160 = vpack.c.b16 %v2128, %v2127
        %2193 = vmatpush.bf16.msra.mxu0 %v2136
        %2194 = vmatpush.bf16.msra.mxu0 %v2135
        %2195 = vmatpush.bf16.msra.mxu0 %v2134
        %2196 = vmatpush.bf16.msra.mxu0 %v2133
        %2197 = vmatpush.bf16.msra.mxu0 %v2132
        %2198 = vmatpush.bf16.msra.mxu0 %v2131
        %2199 = vmatpush.bf16.msra.mxu0 %v2130
        %2200 = vmatpush.bf16.msra.mxu0 %v2129
        %2201 = vmatmul.bf16.gmra.mxu0 %v1901
        %v2202 = vpop.f32.mrf.mxu0
        %v2203 = vadd.f32 %v1999, %v2202
        %v2204 = vpop.f32.mrf.mxu0
        %v2205 = vadd.f32 %v1999, %v2204
        %2206 = vmatmul.bf16.gmra.mxu0 %v1905
        %v2207 = vpop.f32.mrf.mxu0
        %v2208 = vadd.f32 %v1999, %v2207
        %v2209 = vpop.f32.mrf.mxu0
        %v2210 = vadd.f32 %v1999, %v2209
        %2211 = vmatmul.bf16.gmra.mxu0 %v1909
        %v2212 = vpop.f32.mrf.mxu0
        %v2213 = vadd.f32 %v1999, %v2212
        %v2214 = vpop.f32.mrf.mxu0
        %v2215 = vadd.f32 %v1999, %v2214
        %2216 = vmatmul.bf16.gmra.mxu0 %v1913
        %v2217 = vpop.f32.mrf.mxu0
        %v2218 = vadd.f32 %v1999, %v2217
        %v2219 = vpop.f32.mrf.mxu0
        %v2220 = vadd.f32 %v1999, %v2219
        %2221 = vmatmul.bf16.gmra.mxu0 %v1917
        %v2222 = vpop.f32.mrf.mxu0
        %v2223 = vadd.f32 %v1999, %v2222
        %v2224 = vpop.f32.mrf.mxu0
        %v2225 = vadd.f32 %v1999, %v2224
        %2226 = vmatmul.bf16.gmra.mxu0 %v1921
        %v2227 = vpop.f32.mrf.mxu0
        %v2228 = vadd.f32 %v1999, %v2227
        %v2229 = vpop.f32.mrf.mxu0
        %v2230 = vadd.f32 %v1999, %v2229
        %2231 = vmatmul.bf16.gmra.mxu0 %v1925
        %v2232 = vpop.f32.mrf.mxu0
        %v2233 = vadd.f32 %v1999, %v2232
        %v2234 = vpop.f32.mrf.mxu0
        %v2235 = vadd.f32 %v1999, %v2234
        %2236 = vmatmul.bf16.gmra.mxu0 %v1929
        %v2237 = vpop.f32.mrf.mxu0
        %v2238 = vadd.f32 %v1999, %v2237
        %v2239 = vpop.f32.mrf.mxu0
        %v2240 = vadd.f32 %v1999, %v2239
        %2241 = vdwg.mxu0
        %2242 = vmatpush.bf16.msra.mxu0 %v2144
        %2243 = vmatpush.bf16.msra.mxu0 %v2143
        %2244 = vmatpush.bf16.msra.mxu0 %v2142
        %2245 = vmatpush.bf16.msra.mxu0 %v2141
        %2246 = vmatpush.bf16.msra.mxu0 %v2140
        %2247 = vmatpush.bf16.msra.mxu0 %v2139
        %2248 = vmatpush.bf16.msra.mxu0 %v2138
        %2249 = vmatpush.bf16.msra.mxu0 %v2137
        %2250 = vmatmul.bf16.gmra.mxu0 %v1902
        %v2251 = vpop.f32.mrf.mxu0
        %v2252 = vadd.f32 %v2203, %v2251
        %v2253 = vpop.f32.mrf.mxu0
        %v2254 = vadd.f32 %v2205, %v2253
        %2255 = vmatmul.bf16.gmra.mxu0 %v1906
        %v2256 = vpop.f32.mrf.mxu0
        %v2257 = vadd.f32 %v2208, %v2256
        %v2258 = vpop.f32.mrf.mxu0
        %v2259 = vadd.f32 %v2210, %v2258
        %2260 = vmatmul.bf16.gmra.mxu0 %v1910
        %v2261 = vpop.f32.mrf.mxu0
        %v2262 = vadd.f32 %v2213, %v2261
        %v2263 = vpop.f32.mrf.mxu0
        %v2264 = vadd.f32 %v2215, %v2263
        %2265 = vmatmul.bf16.gmra.mxu0 %v1914
        %v2266 = vpop.f32.mrf.mxu0
        %v2267 = vadd.f32 %v2218, %v2266
        %v2268 = vpop.f32.mrf.mxu0
        %v2269 = vadd.f32 %v2220, %v2268
        %2270 = vmatmul.bf16.gmra.mxu0 %v1918
        %v2271 = vpop.f32.mrf.mxu0
        %v2272 = vadd.f32 %v2223, %v2271
        %v2273 = vpop.f32.mrf.mxu0
        %v2274 = vadd.f32 %v2225, %v2273
        %2275 = vmatmul.bf16.gmra.mxu0 %v1922
        %v2276 = vpop.f32.mrf.mxu0
        %v2277 = vadd.f32 %v2228, %v2276
        %v2278 = vpop.f32.mrf.mxu0
        %v2279 = vadd.f32 %v2230, %v2278
        %2280 = vmatmul.bf16.gmra.mxu0 %v1926
        %v2281 = vpop.f32.mrf.mxu0
        %v2282 = vadd.f32 %v2233, %v2281
        %v2283 = vpop.f32.mrf.mxu0
        %v2284 = vadd.f32 %v2235, %v2283
        %2285 = vmatmul.bf16.gmra.mxu0 %v1930
        %v2286 = vpop.f32.mrf.mxu0
        %v2287 = vadd.f32 %v2238, %v2286
        %v2288 = vpop.f32.mrf.mxu0
        %v2289 = vadd.f32 %v2240, %v2288
        %2290 = vdwg.mxu0
        %2291 = vmatpush.bf16.msra.mxu0 %v2152
        %2292 = vmatpush.bf16.msra.mxu0 %v2151
        %2293 = vmatpush.bf16.msra.mxu0 %v2150
        %2294 = vmatpush.bf16.msra.mxu0 %v2149
        %2295 = vmatpush.bf16.msra.mxu0 %v2148
        %2296 = vmatpush.bf16.msra.mxu0 %v2147
        %2297 = vmatpush.bf16.msra.mxu0 %v2146
        %2298 = vmatpush.bf16.msra.mxu0 %v2145
        %2299 = vmatmul.bf16.gmra.mxu0 %v1903
        %v2300 = vpop.f32.mrf.mxu0
        %v2301 = vadd.f32 %v2252, %v2300
        %v2302 = vpop.f32.mrf.mxu0
        %v2303 = vadd.f32 %v2254, %v2302
        %2304 = vmatmul.bf16.gmra.mxu0 %v1907
        %v2305 = vpop.f32.mrf.mxu0
        %v2306 = vadd.f32 %v2257, %v2305
        %v2307 = vpop.f32.mrf.mxu0
        %v2308 = vadd.f32 %v2259, %v2307
        %2309 = vmatmul.bf16.gmra.mxu0 %v1911
        %v2310 = vpop.f32.mrf.mxu0
        %v2311 = vadd.f32 %v2262, %v2310
        %v2312 = vpop.f32.mrf.mxu0
        %v2313 = vadd.f32 %v2264, %v2312
        %2314 = vmatmul.bf16.gmra.mxu0 %v1915
        %v2315 = vpop.f32.mrf.mxu0
        %v2316 = vadd.f32 %v2267, %v2315
        %v2317 = vpop.f32.mrf.mxu0
        %v2318 = vadd.f32 %v2269, %v2317
        %2319 = vmatmul.bf16.gmra.mxu0 %v1919
        %v2320 = vpop.f32.mrf.mxu0
        %v2321 = vadd.f32 %v2272, %v2320
        %v2322 = vpop.f32.mrf.mxu0
        %v2323 = vadd.f32 %v2274, %v2322
        %2324 = vmatmul.bf16.gmra.mxu0 %v1923
        %v2325 = vpop.f32.mrf.mxu0
        %v2326 = vadd.f32 %v2277, %v2325
        %v2327 = vpop.f32.mrf.mxu0
        %v2328 = vadd.f32 %v2279, %v2327
        %2329 = vmatmul.bf16.gmra.mxu0 %v1927
        %v2330 = vpop.f32.mrf.mxu0
        %v2331 = vadd.f32 %v2282, %v2330
        %v2332 = vpop.f32.mrf.mxu0
        %v2333 = vadd.f32 %v2284, %v2332
        %2334 = vmatmul.bf16.gmra.mxu0 %v1931
        %v2335 = vpop.f32.mrf.mxu0
        %v2336 = vadd.f32 %v2287, %v2335
        %v2337 = vpop.f32.mrf.mxu0
        %v2338 = vadd.f32 %v2289, %v2337
        %2339 = vdwg.mxu0
        %2340 = vmatpush.bf16.msra.mxu0 %v2160
        %2341 = vmatpush.bf16.msra.mxu0 %v2159
        %2342 = vmatpush.bf16.msra.mxu0 %v2158
        %2343 = vmatpush.bf16.msra.mxu0 %v2157
        %2344 = vmatpush.bf16.msra.mxu0 %v2156
        %2345 = vmatpush.bf16.msra.mxu0 %v2155
        %2346 = vmatpush.bf16.msra.mxu0 %v2154
        %2347 = vmatpush.bf16.msra.mxu0 %v2153
        %2348 = vmatmul.bf16.gmra.mxu0 %v1904
        %v2349 = vpop.f32.mrf.mxu0
        %v2350 = vadd.f32 %v2301, %v2349
        %v2351 = vpop.f32.mrf.mxu0
        %v2352 = vadd.f32 %v2303, %v2351
        %2353 = vmatmul.bf16.gmra.mxu0 %v1908
        %v2354 = vpop.f32.mrf.mxu0
        %v2355 = vadd.f32 %v2306, %v2354
        %v2356 = vpop.f32.mrf.mxu0
        %v2357 = vadd.f32 %v2308, %v2356
        %2358 = vmatmul.bf16.gmra.mxu0 %v1912
        %v2359 = vpop.f32.mrf.mxu0
        %v2360 = vadd.f32 %v2311, %v2359
        %v2361 = vpop.f32.mrf.mxu0
        %v2362 = vadd.f32 %v2313, %v2361
        %2363 = vmatmul.bf16.gmra.mxu0 %v1916
        %v2364 = vpop.f32.mrf.mxu0
        %v2365 = vadd.f32 %v2316, %v2364
        %v2366 = vpop.f32.mrf.mxu0
        %v2367 = vadd.f32 %v2318, %v2366
        %2368 = vmatmul.bf16.gmra.mxu0 %v1920
        %v2369 = vpop.f32.mrf.mxu0
        %v2370 = vadd.f32 %v2321, %v2369
        %v2371 = vpop.f32.mrf.mxu0
        %v2372 = vadd.f32 %v2323, %v2371
        %2373 = vmatmul.bf16.gmra.mxu0 %v1924
        %v2374 = vpop.f32.mrf.mxu0
        %v2375 = vadd.f32 %v2326, %v2374
        %v2376 = vpop.f32.mrf.mxu0
        %v2377 = vadd.f32 %v2328, %v2376
        %2378 = vmatmul.bf16.gmra.mxu0 %v1928
        %v2379 = vpop.f32.mrf.mxu0
        %v2380 = vadd.f32 %v2331, %v2379
        %v2381 = vpop.f32.mrf.mxu0
        %v2382 = vadd.f32 %v2333, %v2381
        %2383 = vmatmul.bf16.gmra.mxu0 %v1932
        %v2384 = vpop.f32.mrf.mxu0
        %v2385 = vadd.f32 %v2336, %v2384
        %v2386 = vpop.f32.mrf.mxu0
        %v2387 = vadd.f32 %v2338, %v2386
        %2388 = vdwg.mxu0
        %v2389 = vmax.f32 %v2350, 0.0
        %v2390 = vmax.f32 %v2352, 0.0
        %v2391 = vmax.f32 %v2355, 0.0
        %v2392 = vmax.f32 %v2357, 0.0
        %v2393 = vmax.f32 %v2360, 0.0
        %v2394 = vmax.f32 %v2362, 0.0
        %v2395 = vmax.f32 %v2365, 0.0
        %v2396 = vmax.f32 %v2367, 0.0
        %v2397 = vmax.f32 %v2370, 0.0
        %v2398 = vmax.f32 %v2372, 0.0
        %v2399 = vmax.f32 %v2375, 0.0
        %v2400 = vmax.f32 %v2377, 0.0
        %v2401 = vmax.f32 %v2380, 0.0
        %v2402 = vmax.f32 %v2382, 0.0
        %v2403 = vmax.f32 %v2385, 0.0
        %v2404 = vmax.f32 %v2387, 0.0
        %2405 = vst [vmem:[%s455] sm:$0xff] %v2389
        %2406 = vst [vmem:[%s455 + $0x8] sm:$0xff] %v2390
        %2407 = vst [vmem:[%s455 + $0x10] sm:$0xff] %v2391
        %2408 = vst [vmem:[%s455 + $0x18] sm:$0xff] %v2392
        %2409 = vst [vmem:[%s455 + $0x20] sm:$0xff] %v2393
        %2410 = vst [vmem:[%s455 + $0x28] sm:$0xff] %v2394
        %2411 = vst [vmem:[%s455 + $0x30] sm:$0xff] %v2395
        %2412 = vst [vmem:[%s455 + $0x38] sm:$0xff] %v2396
        %2413 = vst [vmem:[%s455 + $0x40] sm:$0xff] %v2397
        %2414 = vst [vmem:[%s455 + $0x48] sm:$0xff] %v2398
        %2415 = vst [vmem:[%s455 + $0x50] sm:$0xff] %v2399
        %2416 = vst [vmem:[%s455 + $0x58] sm:$0xff] %v2400
        %2417 = vst [vmem:[%s455 + $0x60] sm:$0xff] %v2401
        %2418 = vst [vmem:[%s455 + $0x68] sm:$0xff] %v2402
        %2419 = vst [vmem:[%s455 + $0x70] sm:$0xff] %v2403
        %2420 = vst [vmem:[%s455 + $0x78] sm:$0xff] %v2404
        %s2421 = smul.u32 16, %s25
        %p2422 = scmp.lt.s32.totalorder %s2421, 31
        %s2423 = scalar_select %p2422, %s2421, 31
        %s2424 = smul.addr %s2423, 8
        %s2425 = scalar_lea.vmem %s11, %s2424
        // Predicated region
        $region81: #{_forward_jit.1} parent=63 // pred_check
          %p2426 = pneg %p279
        $region82: #{_forward_jit.1} parent=63 // pred_check_branch
          %2428 = sbr.rel (%p2426) target = $region84
        $region83: #{_forward_jit.1} parent=63 // pred_region
          %s2429 = smul.u32 16, %s25
        $region84: #{_forward_jit.1} parent=63 // pred_fallthru
          _
      $region64: #{_forward_jit.1} parent=5 // pred_fallthru
        _
      %p2430 = scmp.le.s32.totalorder 2, %s20
      // Predicated region
      $region85: #{_forward_jit.1} parent=5 // pred_check
        %p2431 = pneg %p2430
      $region86: #{_forward_jit.1} parent=5 // pred_check_branch
        %2433 = sbr.rel (%p2431) target = $region88
      $region87: #{_forward_jit.1} parent=5 // pred_region
        %s2434 = ssub.s32 %s20, 2
        // Predicated region
        $region89: #{_forward_jit.1} parent=87 // pred_check
          %p2435 = pneg %p285
        $region90: #{_forward_jit.1} parent=87 // pred_check_branch
          %2437 = sbr.rel (%p2435) target = $region92
        $region91: #{_forward_jit.1} parent=87 // pred_region
          %s2438 = smul.u32 16, %s26
          %p2439 = scmp.lt.s32.totalorder %s2438, 31
          %s2440 = scalar_select %p2439, %s2438, 31
          %s2441 = smul.addr %s2440, 8
          %s2442 = scalar_lea.vmem %s11, %s2441
        $region92: #{_forward_jit.1} parent=87 // pred_fallthru
          _
      $region88: #{_forward_jit.1} parent=5 // pred_fallthru
        _
    $region6: #{_forward_jit.1} parent=1 // loop_footer
      %s24 = sadd.s32 1, %s20
    $region7: #{_forward_jit.1} parent=1 // loop_footer_branch
      %19 = sbr.rel target = $region3
    $region8: #{_forward_jit.1} parent=1 // loop_exit
      _
    %2443 = vsyncpa [#allocation3], 1
    %s2444 = scalar_lea.sflag [#allocation3], 1
    %2445 = vsyncpa %s2444, 1
    %2446 = vsyncpa [#allocation5], 1
    %2447 = vsyncpa [#allocation8], 1

</llo_original>
